<compile_context>
chip_gen: v6e
topology: v6e:2x2x1
jax: 0.10.0
libtpu: 0.0.40
codegen_flags: <defaults>
</compile_context>

<pallas_src>
import functools

import jax
import jax.numpy as jnp
from jax.experimental import pallas as pl
from jax.experimental.pallas import tpu as pltpu

LATENT_Z = 25
LATENT_C = 3
HIDDEN_DIM = 400
OUTPUT_DIM = 784          # flattened 28x28 decoder output

ZIN = LATENT_Z + LATENT_C  # 28 (cat([z, c]) width)
ZIN_PAD = 32               # fused-input lane pad
HIDDEN_PAD = 512           # 400 -> 512 (lane multiple)

TB_DEFAULT = 512           # batch tile for large batches


def _round_up(x, m):
    return ((x + m - 1) // m) * m


def _pad2(a, rows, cols, dtype):
    """Zero-pad a 2-D array to (rows, cols) and cast."""
    r, c = a.shape
    return jnp.pad(a, ((0, rows - r), (0, cols - c))).astype(dtype)


def _pick_tb(batch):
    """Batch tile: big tiles for big batches, >= 2 grid steps for mid batches."""
    if batch <= 16:
        return max(8, _round_up(batch, 8))          # single sublane-aligned tile
    if batch <= 2 * TB_DEFAULT:
        return _round_up(-(-batch // 2), 8)         # 2 tiles -> both v7x TCs busy
    return TB_DEFAULT


def _default_bf16_tail():
    """bf16 elementwise tail only where the VPU/EUP are bf16-native (not v5e)."""
    try:
        kind = jax.devices()[0].device_kind.lower()
    except Exception:
        return True
    return "v5" not in kind


def decoder_kernel(x_ref, w1_ref, b1_ref, w2_ref, b2_ref, w3_ref, b3_ref,
                   o_ref, *, bf16_tail):
    """3-layer MLP (Linear+ReLU, Linear+ReLU, Linear+Sigmoid) on one batch tile."""
    tail_dt = jnp.bfloat16 if bf16_tail else jnp.float32
    half = jnp.asarray(0.5, tail_dt)

    x = x_ref[...]                                                    # (tb, 32) bf16

    # Layer 1: bf16 MXU, f32 accumulate; bias/ReLU in tail dtype.
    h = jnp.dot(x, w1_ref[...], preferred_element_type=jnp.float32)
    h = jnp.maximum(h.astype(tail_dt) + b1_ref[...].astype(tail_dt), 0)
    h = h.astype(jnp.bfloat16)

    # Layer 2.
    h2 = jnp.dot(h, w2_ref[...], preferred_element_type=jnp.float32)
    h2 = jnp.maximum(h2.astype(tail_dt) + b2_ref[...].astype(tail_dt), 0)
    h2 = h2.astype(jnp.bfloat16)

    # Layer 3 + sigmoid.  0.5*tanh(0.5*y)+0.5 == sigmoid(y); tanh runs on the
    # EUP slot (free filler under the MXU) instead of a VPU divide.
    y = jnp.dot(h2, w3_ref[...], preferred_element_type=jnp.float32)
    y = y.astype(tail_dt) + b3_ref[...].astype(tail_dt)
    o_ref[...] = (half * jnp.tanh(half * y) + half).astype(o_ref.dtype)


def pack_params(params):
    """Logical f32 params -> padded bf16 weights / f32 biases for the kernel."""
    w1, b1, w2, b2, w3, b3 = params
    w1p = _pad2(w1, ZIN_PAD, HIDDEN_PAD, jnp.bfloat16)      # (32, 512)
    b1p = _pad2(b1, 1, HIDDEN_PAD, jnp.float32)             # (1, 512)
    w2p = _pad2(w2, HIDDEN_PAD, HIDDEN_PAD, jnp.bfloat16)   # (512, 512)
    b2p = _pad2(b2, 1, HIDDEN_PAD, jnp.float32)             # (1, 512)
    w3p = _pad2(w3, HIDDEN_PAD, OUTPUT_DIM, jnp.bfloat16)   # (512, 784) no col pad
    b3p = _pad2(b3, 1, OUTPUT_DIM, jnp.float32)             # (1, 784)
    return (w1p, b1p, w2p, b2p, w3p, b3p)


@functools.partial(jax.jit, static_argnames=("tb", "out_dtype", "bf16_tail"))
def _forward(z, c, packed_params, *, tb, out_dtype, bf16_tail):
    w1, b1, w2, b2, w3, b3 = packed_params
    B = z.shape[0]
    Bp = _round_up(B, tb)

    # Fuse cat([z, c]) in the wrapper: one (Bp, 32) bf16 input, zero-padded.
    x = jnp.concatenate([z.astype(jnp.float32), c.astype(jnp.float32)], axis=1)
    x = jnp.pad(x, ((0, Bp - B), (0, ZIN_PAD - ZIN))).astype(jnp.bfloat16)

    grid = (Bp // tb,)
    batch_spec = lambda cols: pl.BlockSpec((tb, cols), lambda i: (i, 0))
    # Constant-index (VMEM-resident) operands don't need a second pipeline buffer.
    const_spec = lambda rows, cols: pl.BlockSpec(
        (rows, cols), lambda i: (0, 0), pipeline_mode=pl.Buffered(1))

    out_itemsize = jnp.dtype(out_dtype).itemsize
    flops = 2 * Bp * (ZIN_PAD * HIDDEN_PAD + HIDDEN_PAD * HIDDEN_PAD
                      + HIDDEN_PAD * OUTPUT_DIM)
    weight_bytes = 2 * (ZIN_PAD * HIDDEN_PAD + HIDDEN_PAD * HIDDEN_PAD
                        + HIDDEN_PAD * OUTPUT_DIM)
    bias_bytes = 4 * (2 * HIDDEN_PAD + OUTPUT_DIM)
    io_bytes = 2 * Bp * ZIN_PAD + out_itemsize * Bp * OUTPUT_DIM
    cost = pl.CostEstimate(flops=flops, transcendentals=Bp * OUTPUT_DIM,
                           bytes_accessed=weight_bytes + bias_bytes + io_bytes)

    out = pl.pallas_call(
        functools.partial(decoder_kernel, bf16_tail=bf16_tail),
        out_shape=jax.ShapeDtypeStruct((Bp, OUTPUT_DIM), out_dtype),
        grid=grid,
        in_specs=[
            batch_spec(ZIN_PAD),                 # x = [z | c | 0-pad], bf16
            const_spec(ZIN_PAD, HIDDEN_PAD),     # w1
            const_spec(1, HIDDEN_PAD),           # b1
            const_spec(HIDDEN_PAD, HIDDEN_PAD),  # w2
            const_spec(1, HIDDEN_PAD),           # b2
            const_spec(HIDDEN_PAD, OUTPUT_DIM),  # w3 (logical 784-wide)
            const_spec(1, OUTPUT_DIM),           # b3
        ],
        out_specs=pl.BlockSpec((tb, OUTPUT_DIM), lambda i: (i, 0)),
        compiler_params=pltpu.CompilerParams(
            dimension_semantics=("parallel",),
            vmem_limit_bytes=64 * 1024 * 1024),
        cost_estimate=cost,
    )(x, w1, b1, w2, b2, w3, b3)

    # Output width is already the logical 784 -> only padded batch rows (if any)
    # need slicing; no column slice, no extra read/write of the full output.
    return out if Bp == B else out[:B]


def client_decoder_forward(z, c, packed_params, *, tb=None,
                           out_dtype=jnp.bfloat16, bf16_tail=None):
    """z: (B, 25), c: (B, 3)  ->  (B, 784) in `out_dtype` (post-sigmoid, in [0,1])."""
    if tb is None:
        tb = _pick_tb(z.shape[0])
    if bf16_tail is None:
        bf16_tail = _default_bf16_tail()
    return _forward(z, c, packed_params, tb=tb, out_dtype=out_dtype,
                    bf16_tail=bf16_tail)


def init_params(key):
    """nn.Linear-style init (U[-1/sqrt(fan_in), +]); weights stored as (in, out)."""
    dims = [(ZIN, HIDDEN_DIM), (HIDDEN_DIM, HIDDEN_DIM), (HIDDEN_DIM, OUTPUT_DIM)]
    params = []
    for fan_in, fan_out in dims:
        key, kw, kb = jax.random.split(key, 3)
        bound = 1.0 / jnp.sqrt(jnp.float32(fan_in))
        w = jax.random.uniform(kw, (fan_in, fan_out), jnp.float32, -bound, bound)
        b = jax.random.uniform(kb, (1, fan_out), jnp.float32, -bound, bound)
        params += [w, b]
    return tuple(params)


def reference_forward(z, c, params):
    """Pure-f32 JAX reference matching the PyTorch module."""
    w1, b1, w2, b2, w3, b3 = params
    x = jnp.concatenate([z, c], axis=1)
    h = jax.nn.relu(x @ w1 + b1)
    h = jax.nn.relu(h @ w2 + b2)
    return jax.nn.sigmoid(h @ w3 + b3)


if __name__ == "__main__":
    key = jax.random.PRNGKey(0)
    kp, kz, kc = jax.random.split(key, 3)

    B = 8
    params = init_params(kp)
    packed = pack_params(params)
    z = jax.random.normal(kz, (B, LATENT_Z), jnp.float32)
    c = jax.random.normal(kc, (B, LATENT_C), jnp.float32)

    out = client_decoder_forward(z, c, packed)     # bf16 output by default
    out = jax.block_until_ready(out)

    ref = reference_forward(z, c, params)
    assert out.shape == (B, OUTPUT_DIM)
    # bf16 MXU operands + bf16 output vs f32 reference: sigmoid range [0, 1],
    # observed error is ~1e-3; 2e-2 tolerance documents the quantization.
    err = jnp.max(jnp.abs(out.astype(jnp.float32) - ref))
    assert err < 2e-2, f"mismatch vs. JAX reference (max abs err {err})"

    print("KERNEL_OK")
</pallas_src>

<mosaic_0001>
module attributes {stable_mosaic.version = 11 : i64} {
  func.func @decoder_kernel(%arg0: i32, %arg1: memref<8x32xbf16, #tpu.memory_space<vmem>>, %arg2: memref<32x512xbf16, #tpu.memory_space<vmem>>, %arg3: memref<1x512xf32, #tpu.memory_space<vmem>>, %arg4: memref<512x512xbf16, #tpu.memory_space<vmem>>, %arg5: memref<1x512xf32, #tpu.memory_space<vmem>>, %arg6: memref<512x784xbf16, #tpu.memory_space<vmem>>, %arg7: memref<1x784xf32, #tpu.memory_space<vmem>>, %arg8: memref<8x784xbf16, #tpu.memory_space<vmem>>) attributes {dimension_semantics = [#tpu.dimension_semantics<parallel>], iteration_bounds = array<i64: 1>, scalar_prefetch = 0 : i64, scratch_operands = 0 : i64, tpu.core_type = #tpu.core_type<tc>, window_params = [{transform_indices = @transform_0, window_bounds = array<i64: 8, 32>}, {pipeline_mode = #tpu.pipeline_mode<synchronous>, transform_indices = @transform_1, window_bounds = array<i64: 32, 512>}, {pipeline_mode = #tpu.pipeline_mode<synchronous>, transform_indices = @transform_2, window_bounds = array<i64: 1, 512>}, {pipeline_mode = #tpu.pipeline_mode<synchronous>, transform_indices = @transform_3, window_bounds = array<i64: 512, 512>}, {pipeline_mode = #tpu.pipeline_mode<synchronous>, transform_indices = @transform_4, window_bounds = array<i64: 1, 512>}, {pipeline_mode = #tpu.pipeline_mode<synchronous>, transform_indices = @transform_5, window_bounds = array<i64: 512, 784>}, {pipeline_mode = #tpu.pipeline_mode<synchronous>, transform_indices = @transform_6, window_bounds = array<i64: 1, 784>}, {transform_indices = @transform_7, window_bounds = array<i64: 8, 784>}]} {
    %c0 = arith.constant 0 : index
    %c0_0 = arith.constant 0 : index
    %0 = vector.load %arg1[%c0, %c0_0] : memref<8x32xbf16, #tpu.memory_space<vmem>>, vector<8x32xbf16>
    %c0_1 = arith.constant 0 : index
    %c0_2 = arith.constant 0 : index
    %1 = vector.load %arg2[%c0_1, %c0_2] : memref<32x512xbf16, #tpu.memory_space<vmem>>, vector<32x512xbf16>
    %cst = arith.constant dense<0.000000e+00> : vector<8x512xf32>
    %2 = tpu.matmul %0, %1, %cst {dimension_numbers = #tpu.dot_dimension_numbers<[1], [0], [0], [1], [0, 0, 1, 1], [], []>} : vector<8x32xbf16>, vector<32x512xbf16>, vector<8x512xf32> -> vector<8x512xf32>
    %3 = arith.truncf %2 : vector<8x512xf32> to vector<8x512xbf16>
    %c0_3 = arith.constant 0 : index
    %c0_4 = arith.constant 0 : index
    %4 = vector.load %arg3[%c0_3, %c0_4] : memref<1x512xf32, #tpu.memory_space<vmem>>, vector<1x512xf32>
    %5 = arith.truncf %4 : vector<1x512xf32> to vector<1x512xbf16>
    %6 = vector.broadcast %5 : vector<1x512xbf16> to vector<8x512xbf16>
    %7 = arith.addf %3, %6 : vector<8x512xbf16>
    %cst_5 = arith.constant 0.000000e+00 : bf16
    %8 = vector.broadcast %cst_5 : bf16 to vector<8x512xbf16>
    %9 = arith.maximumf %7, %8 : vector<8x512xbf16>
    %c0_6 = arith.constant 0 : index
    %c0_7 = arith.constant 0 : index
    %10 = vector.load %arg4[%c0_6, %c0_7] : memref<512x512xbf16, #tpu.memory_space<vmem>>, vector<512x512xbf16>
    %cst_8 = arith.constant dense<0.000000e+00> : vector<8x512xf32>
    %11 = tpu.matmul %9, %10, %cst_8 {dimension_numbers = #tpu.dot_dimension_numbers<[1], [0], [0], [1], [0, 0, 1, 1], [], []>} : vector<8x512xbf16>, vector<512x512xbf16>, vector<8x512xf32> -> vector<8x512xf32>
    %12 = arith.truncf %11 : vector<8x512xf32> to vector<8x512xbf16>
    %c0_9 = arith.constant 0 : index
    %c0_10 = arith.constant 0 : index
    %13 = vector.load %arg5[%c0_9, %c0_10] : memref<1x512xf32, #tpu.memory_space<vmem>>, vector<1x512xf32>
    %14 = arith.truncf %13 : vector<1x512xf32> to vector<1x512xbf16>
    %15 = vector.broadcast %14 : vector<1x512xbf16> to vector<8x512xbf16>
    %16 = arith.addf %12, %15 : vector<8x512xbf16>
    %cst_11 = arith.constant 0.000000e+00 : bf16
    %17 = vector.broadcast %cst_11 : bf16 to vector<8x512xbf16>
    %18 = arith.maximumf %16, %17 : vector<8x512xbf16>
    %c0_12 = arith.constant 0 : index
    %c0_13 = arith.constant 0 : index
    %19 = vector.load %arg6[%c0_12, %c0_13] : memref<512x784xbf16, #tpu.memory_space<vmem>>, vector<512x784xbf16>
    %cst_14 = arith.constant dense<0.000000e+00> : vector<8x784xf32>
    %20 = tpu.matmul %18, %19, %cst_14 {dimension_numbers = #tpu.dot_dimension_numbers<[1], [0], [0], [1], [0, 0, 1, 1], [], []>} : vector<8x512xbf16>, vector<512x784xbf16>, vector<8x784xf32> -> vector<8x784xf32>
    %21 = arith.truncf %20 : vector<8x784xf32> to vector<8x784xbf16>
    %c0_15 = arith.constant 0 : index
    %c0_16 = arith.constant 0 : index
    %22 = vector.load %arg7[%c0_15, %c0_16] : memref<1x784xf32, #tpu.memory_space<vmem>>, vector<1x784xf32>
    %23 = arith.truncf %22 : vector<1x784xf32> to vector<1x784xbf16>
    %24 = vector.broadcast %23 : vector<1x784xbf16> to vector<8x784xbf16>
    %25 = arith.addf %21, %24 : vector<8x784xbf16>
    %cst_17 = arith.constant 5.000000e-01 : bf16
    %26 = vector.broadcast %cst_17 : bf16 to vector<8x784xbf16>
    %27 = arith.mulf %26, %25 : vector<8x784xbf16>
    %28 = math.tanh %27 : vector<8x784xbf16>
    %cst_18 = arith.constant 5.000000e-01 : bf16
    %29 = vector.broadcast %cst_18 : bf16 to vector<8x784xbf16>
    %30 = arith.mulf %29, %28 : vector<8x784xbf16>
    %cst_19 = arith.constant 5.000000e-01 : bf16
    %31 = vector.broadcast %cst_19 : bf16 to vector<8x784xbf16>
    %32 = arith.addf %30, %31 : vector<8x784xbf16>
    %c0_20 = arith.constant 0 : index
    %c0_21 = arith.constant 0 : index
    %33 = vector.load %arg8[%c0_20, %c0_21] : memref<8x784xbf16, #tpu.memory_space<vmem>>, vector<8x784xbf16>
    tpu.vector_store %arg8[%c0_20, %c0_21], %32 {strides = array<i32>} : memref<8x784xbf16, #tpu.memory_space<vmem>>, vector<8x784xbf16>,
    return
  }
  func.func @transform_0(%arg0: i32) -> (i32, i32) {
    %c0_i32 = arith.constant 0 : i32
    %c0_i32_0 = arith.constant 0 : i32
    return %arg0, %c0_i32 : i32, i32
  }
  func.func @transform_1(%arg0: i32) -> (i32, i32) {
    %c0_i32 = arith.constant 0 : i32
    %c0_i32_0 = arith.constant 0 : i32
    %c0_i32_1 = arith.constant 0 : i32
    return %c0_i32, %c0_i32_0 : i32, i32
  }
  func.func @transform_2(%arg0: i32) -> (i32, i32) {
    %c0_i32 = arith.constant 0 : i32
    %c0_i32_0 = arith.constant 0 : i32
    %c0_i32_1 = arith.constant 0 : i32
    return %c0_i32, %c0_i32_0 : i32, i32
  }
  func.func @transform_3(%arg0: i32) -> (i32, i32) {
    %c0_i32 = arith.constant 0 : i32
    %c0_i32_0 = arith.constant 0 : i32
    %c0_i32_1 = arith.constant 0 : i32
    return %c0_i32, %c0_i32_0 : i32, i32
  }
  func.func @transform_4(%arg0: i32) -> (i32, i32) {
    %c0_i32 = arith.constant 0 : i32
    %c0_i32_0 = arith.constant 0 : i32
    %c0_i32_1 = arith.constant 0 : i32
    return %c0_i32, %c0_i32_0 : i32, i32
  }
  func.func @transform_5(%arg0: i32) -> (i32, i32) {
    %c0_i32 = arith.constant 0 : i32
    %c0_i32_0 = arith.constant 0 : i32
    %c0_i32_1 = arith.constant 0 : i32
    return %c0_i32, %c0_i32_0 : i32, i32
  }
  func.func @transform_6(%arg0: i32) -> (i32, i32) {
    %c0_i32 = arith.constant 0 : i32
    %c0_i32_0 = arith.constant 0 : i32
    %c0_i32_1 = arith.constant 0 : i32
    return %c0_i32, %c0_i32_0 : i32, i32
  }
  func.func @transform_7(%arg0: i32) -> (i32, i32) {
    %c0_i32 = arith.constant 0 : i32
    %c0_i32_0 = arith.constant 0 : i32
    return %arg0, %c0_i32 : i32, i32
  }
}

</mosaic_0001>

<llo_original>
// kernel: _forward.1
$region0: #{_forward.1}
  #allocation0 [shape = 'u32[]', space=smem, size = 0x4, offset = 0x4, fixed_abs, tag = 'smem constant byte address 0x4 - core index']
  #allocation1 [shape = 'u32[144,128]{1,0:T(1,128)}', space=vmem, size = 0x12000, scoped, tag = 'internal scratch']
  %s0 = inlined_call_operand.vmem [shape: bf16[8,32], index: 0, kind: input, shape index: {}]
  %s1 = inlined_call_operand.vmem [shape: bf16[32,512], index: 1, kind: input, shape index: {}]
  %s2 = inlined_call_operand.vmem [shape: f32[1,512], index: 2, kind: input, shape index: {}]
  %s3 = inlined_call_operand.vmem [shape: bf16[512,512], index: 3, kind: input, shape index: {}]
  %s4 = inlined_call_operand.vmem [shape: f32[1,512], index: 4, kind: input, shape index: {}]
  %s5 = inlined_call_operand.vmem [shape: bf16[512,784], index: 5, kind: input, shape index: {}]
  %s6 = inlined_call_operand.vmem [shape: f32[1,784], index: 6, kind: input, shape index: {}]
  %s7 = inlined_call_operand.hbm [shape: bf16[8,784], index: 7, kind: output, shape index: {}]
  %s8 = sld [smem:[#allocation0]]
  $region38: #{_forward.1} parent=0
    _
  %s10 = ssub.s32 1, %s8
  %s11 = scalar_select 0, %s10, %s8
  $region1: #{_forward.1} parent=0
    #allocation2 [shape = 'u8[14336]{0}', space=vmem, size = 0x3800, scoped, tag = 'output window, operand 0, single buffered']
    #allocation3 [shape = 's32[1]{0}', space=sflag, size = 0x4, scoped, tag = 'scoped memory for _forward.1']
    %12 = vsyncpa [#allocation3], 0
    // Predicated region
    $region2: #{_forward.1} parent=1 // pred_check
      _
    $region3: #{_forward.1} parent=1 // pred_check_branch
      %14 = sbr.rel (0) target = $region5
    $region4: #{_forward.1} parent=1 // pred_region
      _
    $region5: #{_forward.1} parent=1 // pred_fallthru
      _
    // Predicated region
    $region6: #{_forward.1} parent=1 // pred_check
      _
    $region7: #{_forward.1} parent=1 // pred_check_branch
      %16 = sbr.rel (0) target = $region9
    $region8: #{_forward.1} parent=1 // pred_region
      _
    $region9: #{_forward.1} parent=1 // pred_fallthru
      _
    // Predicated region
    $region10: #{_forward.1} parent=1 // pred_check
      _
    $region11: #{_forward.1} parent=1 // pred_check_branch
      %18 = sbr.rel (0) target = $region13
    $region12: #{_forward.1} parent=1 // pred_region
      _
    $region13: #{_forward.1} parent=1 // pred_fallthru
      _
    // Predicated region
    $region14: #{_forward.1} parent=1 // pred_check
      _
    $region15: #{_forward.1} parent=1 // pred_check_branch
      %20 = sbr.rel (0) target = $region17
    $region16: #{_forward.1} parent=1 // pred_region
      _
    $region17: #{_forward.1} parent=1 // pred_fallthru
      _
    // Predicated region
    $region18: #{_forward.1} parent=1 // pred_check
      _
    $region19: #{_forward.1} parent=1 // pred_check_branch
      %22 = sbr.rel (0) target = $region21
    $region20: #{_forward.1} parent=1 // pred_region
      _
    $region21: #{_forward.1} parent=1 // pred_fallthru
      _
    // Predicated region
    $region22: #{_forward.1} parent=1 // pred_check
      _
    $region23: #{_forward.1} parent=1 // pred_check_branch
      %24 = sbr.rel (0) target = $region25
    $region24: #{_forward.1} parent=1 // pred_region
      _
    $region25: #{_forward.1} parent=1 // pred_fallthru
      _
    // Predicated region
    $region26: #{_forward.1} parent=1 // pred_check
      _
    $region27: #{_forward.1} parent=1 // pred_check_branch
      %26 = sbr.rel (0) target = $region29
    $region28: #{_forward.1} parent=1 // pred_region
      _
    $region29: #{_forward.1} parent=1 // pred_fallthru
      _
    %v29 = vld [vmem:[%s0] sm:$0xf]
    %v30 = vld [vmem:[%s1] sm:$0xff]
    %v31 = vld [vmem:[%s1 + $0x8] sm:$0xff]
    %v32 = vld [vmem:[%s1 + $0x10] sm:$0xff]
    %v33 = vld [vmem:[%s1 + $0x18] sm:$0xff]
    %v34 = vld [vmem:[%s1 + $0x20] sm:$0xff]
    %v35 = vld [vmem:[%s1 + $0x28] sm:$0xff]
    %v36 = vld [vmem:[%s1 + $0x30] sm:$0xff]
    %v37 = vld [vmem:[%s1 + $0x38] sm:$0xff]
    %v46 = vunpack.c.l.b16 %v30
    %v47 = vunpack.c.h.b16 %v30
    %v48 = vunpack.c.l.b16 %v31
    %v49 = vunpack.c.h.b16 %v31
    %v50 = vunpack.c.l.b16 %v32
    %v51 = vunpack.c.h.b16 %v32
    %v52 = vunpack.c.l.b16 %v33
    %v53 = vunpack.c.h.b16 %v33
    %v54 = vunpack.c.l.b16 %v34
    %v55 = vunpack.c.h.b16 %v34
    %v56 = vunpack.c.l.b16 %v35
    %v57 = vunpack.c.h.b16 %v35
    %v58 = vunpack.c.l.b16 %v36
    %v59 = vunpack.c.h.b16 %v36
    %v60 = vunpack.c.l.b16 %v37
    %v61 = vunpack.c.h.b16 %v37
    %v62 = vpack.c.b16 %v50, %v46
    %v63 = vpack.c.b16 %v51, %v47
    %v64 = vpack.c.b16 %v52, %v48
    %v65 = vpack.c.b16 %v53, %v49
    %v66 = vpack.c.b16 %v58, %v54
    %v67 = vpack.c.b16 %v59, %v55
    %v68 = vpack.c.b16 %v60, %v56
    %v69 = vpack.c.b16 %v61, %v57
    %vm78 = vcmask 261120
    %v80 = vsel %vm78, %v29, 0
    %82 = vmatprep.subr.bf16.mxu0 0
    %83 = vmatpush1.bf16.msra.mxu0 0
    %84 = vmatprep.subr.bf16.mxu0 0
    %85 = vmatpush1.bf16.msra.mxu0 0
    %86 = vmatprep.subr.bf16.mxu0 0
    %87 = vmatpush1.bf16.msra.mxu0 0
    %88 = vmatprep.subr.bf16.mxu0 0
    %89 = vmatpush1.bf16.msra.mxu0 0
    %90 = vmatprep.subr.bf16.mxu0 0
    %91 = vmatpush1.bf16.msra.mxu0 0
    %92 = vmatprep.subr.bf16.mxu0 0
    %93 = vmatpush1.bf16.msra.mxu0 0
    %94 = vmatprep.subr.bf16.mxu0 %v67
    %95 = vmatpush1.bf16.msra.mxu0 %v66
    %96 = vmatprep.subr.bf16.mxu0 %v63
    %97 = vmatpush1.bf16.msra.mxu0 %v62
    %98 = vmatprep.subr.bf16.mxu0 0
    %99 = vmatpush2.bf16.msra.mxu0 0
    %100 = vmatprep.subr.bf16.mxu0 0
    %101 = vmatpush2.bf16.msra.mxu0 0
    %102 = vmatprep.subr.bf16.mxu0 0
    %103 = vmatpush2.bf16.msra.mxu0 0
    %104 = vmatprep.subr.bf16.mxu0 0
    %105 = vmatpush2.bf16.msra.mxu0 0
    %106 = vmatprep.subr.bf16.mxu0 0
    %107 = vmatpush2.bf16.msra.mxu0 0
    %108 = vmatprep.subr.bf16.mxu0 0
    %109 = vmatpush2.bf16.msra.mxu0 0
    %110 = vmatprep.subr.bf16.mxu0 0
    %111 = vmatpush2.bf16.msra.mxu0 0
    %112 = vmatprep.subr.bf16.mxu0 0
    %113 = vmatpush2.bf16.msra.mxu0 0
    %114 = vmatprep.mubr.bf16.mxu0 0
    %115 = vmatmul.mubr.bf16.gmra.mxu0 %v80
    %v116 = vpop.f32.mrf.mxu0
    %v117 = vadd.f32 0.0, %v116
    %v118 = vpop.f32.mrf.mxu0
    %v119 = vadd.f32 0.0, %v118
    %v120 = vpop.f32.mrf.mxu0
    %v121 = vpop.f32.mrf.mxu0
    %122 = vdwg.mxu0
    %123 = vmatprep.subr.bf16.mxu0 0
    %124 = vmatpush1.bf16.msra.mxu0 0
    %125 = vmatprep.subr.bf16.mxu0 0
    %126 = vmatpush1.bf16.msra.mxu0 0
    %127 = vmatprep.subr.bf16.mxu0 0
    %128 = vmatpush1.bf16.msra.mxu0 0
    %129 = vmatprep.subr.bf16.mxu0 0
    %130 = vmatpush1.bf16.msra.mxu0 0
    %131 = vmatprep.subr.bf16.mxu0 0
    %132 = vmatpush1.bf16.msra.mxu0 0
    %133 = vmatprep.subr.bf16.mxu0 0
    %134 = vmatpush1.bf16.msra.mxu0 0
    %135 = vmatprep.subr.bf16.mxu0 %v69
    %136 = vmatpush1.bf16.msra.mxu0 %v68
    %137 = vmatprep.subr.bf16.mxu0 %v65
    %138 = vmatpush1.bf16.msra.mxu0 %v64
    %139 = vmatprep.subr.bf16.mxu0 0
    %140 = vmatpush2.bf16.msra.mxu0 0
    %141 = vmatprep.subr.bf16.mxu0 0
    %142 = vmatpush2.bf16.msra.mxu0 0
    %143 = vmatprep.subr.bf16.mxu0 0
    %144 = vmatpush2.bf16.msra.mxu0 0
    %145 = vmatprep.subr.bf16.mxu0 0
    %146 = vmatpush2.bf16.msra.mxu0 0
    %147 = vmatprep.subr.bf16.mxu0 0
    %148 = vmatpush2.bf16.msra.mxu0 0
    %149 = vmatprep.subr.bf16.mxu0 0
    %150 = vmatpush2.bf16.msra.mxu0 0
    %151 = vmatprep.subr.bf16.mxu0 0
    %152 = vmatpush2.bf16.msra.mxu0 0
    %153 = vmatprep.subr.bf16.mxu0 0
    %154 = vmatpush2.bf16.msra.mxu0 0
    %155 = vmatprep.mubr.bf16.mxu0 0
    %156 = vmatmul.mubr.bf16.gmra.mxu0 %v80
    %v157 = vpop.f32.mrf.mxu0
    %v158 = vadd.f32 0.0, %v157
    %v159 = vpop.f32.mrf.mxu0
    %v160 = vadd.f32 0.0, %v159
    %v161 = vpop.f32.mrf.mxu0
    %v162 = vpop.f32.mrf.mxu0
    %163 = vdwg.mxu0
    %v164 = vpack.c.bf16 %v117, %v117
    %v165 = vpack.c.bf16 %v119, %v119
    %v166 = vpack.c.bf16 %v158, %v158
    %v167 = vpack.c.bf16 %v160, %v160
    %v168 = vld [vmem:[%s2] sm:$0xf]
    %v170 = vlaneseq
    %v171 = vshrl.u32 %v170, 7
    %v172 = vsub.s32 0, %v171
    %v173 = vrot.slane %v168, %v172
    %v174 = vlaneseq
    %v175 = vshrl.u32 %v174, 7
    %v176 = vsub.s32 1, %v175
    %v177 = vrot.slane %v168, %v176
    %v178 = vlaneseq
    %v179 = vshrl.u32 %v178, 7
    %v180 = vsub.s32 2, %v179
    %v181 = vrot.slane %v168, %v180
    %v182 = vlaneseq
    %v183 = vshrl.u32 %v182, 7
    %v184 = vsub.s32 3, %v183
    %v185 = vrot.slane %v168, %v184
    %v190 = vpack.c.bf16 %v173, %v173
    %v191 = vpack.c.bf16 %v177, %v177
    %v192 = vpack.c.bf16 %v181, %v181
    %v193 = vpack.c.bf16 %v185, %v185
    %v195 = vpack.i.b16 %v190, %v190
    %v197 = vlaneseq
    %v198 = vshrl.u32 %v197, 7
    %v199 = vsub.s32 0, %v198
    %v200 = vrot.slane %v195, %v199
    %v202 = vpack.i.b16 %v191, %v191
    %v204 = vlaneseq
    %v205 = vshrl.u32 %v204, 7
    %v206 = vsub.s32 0, %v205
    %v207 = vrot.slane %v202, %v206
    %v209 = vpack.i.b16 %v192, %v192
    %v211 = vlaneseq
    %v212 = vshrl.u32 %v211, 7
    %v213 = vsub.s32 0, %v212
    %v214 = vrot.slane %v209, %v213
    %v216 = vpack.i.b16 %v193, %v193
    %v218 = vlaneseq
    %v219 = vshrl.u32 %v218, 7
    %v220 = vsub.s32 0, %v219
    %v221 = vrot.slane %v216, %v220
    %v222 = vadd.bf16 %v164, %v200
    %v223 = vadd.bf16 %v165, %v207
    %v224 = vadd.bf16 %v166, %v214
    %v225 = vadd.bf16 %v167, %v221
    %v226 = vmax.bf16 %v222, 0
    %v227 = vmax.bf16 %v223, 0
    %v228 = vmax.bf16 %v224, 0
    %v229 = vmax.bf16 %v225, 0
    %v230 = vld [vmem:[%s3] sm:$0xff]
    %v231 = vld [vmem:[%s3 + $0x8] sm:$0xff]
    %v232 = vld [vmem:[%s3 + $0x10] sm:$0xff]
    %v233 = vld [vmem:[%s3 + $0x18] sm:$0xff]
    %v234 = vld [vmem:[%s3 + $0x20] sm:$0xff]
    %v235 = vld [vmem:[%s3 + $0x28] sm:$0xff]
    %v236 = vld [vmem:[%s3 + $0x30] sm:$0xff]
    %v237 = vld [vmem:[%s3 + $0x38] sm:$0xff]
    %v238 = vld [vmem:[%s3 + $0x40] sm:$0xff]
    %v239 = vld [vmem:[%s3 + $0x48] sm:$0xff]
    %v240 = vld [vmem:[%s3 + $0x50] sm:$0xff]
    %v241 = vld [vmem:[%s3 + $0x58] sm:$0xff]
    %v242 = vld [vmem:[%s3 + $0x60] sm:$0xff]
    %v243 = vld [vmem:[%s3 + $0x68] sm:$0xff]
    %v244 = vld [vmem:[%s3 + $0x70] sm:$0xff]
    %v245 = vld [vmem:[%s3 + $0x78] sm:$0xff]
    %v246 = vld [vmem:[%s3 + $0x80] sm:$0xff]
    %v247 = vld [vmem:[%s3 + $0x88] sm:$0xff]
    %v248 = vld [vmem:[%s3 + $0x90] sm:$0xff]
    %v249 = vld [vmem:[%s3 + $0x98] sm:$0xff]
    %v250 = vld [vmem:[%s3 + $0xa0] sm:$0xff]
    %v251 = vld [vmem:[%s3 + $0xa8] sm:$0xff]
    %v252 = vld [vmem:[%s3 + $0xb0] sm:$0xff]
    %v253 = vld [vmem:[%s3 + $0xb8] sm:$0xff]
    %v254 = vld [vmem:[%s3 + $0xc0] sm:$0xff]
    %v255 = vld [vmem:[%s3 + $0xc8] sm:$0xff]
    %v256 = vld [vmem:[%s3 + $0xd0] sm:$0xff]
    %v257 = vld [vmem:[%s3 + $0xd8] sm:$0xff]
    %v258 = vld [vmem:[%s3 + $0xe0] sm:$0xff]
    %v259 = vld [vmem:[%s3 + $0xe8] sm:$0xff]
    %v260 = vld [vmem:[%s3 + $0xf0] sm:$0xff]
    %v261 = vld [vmem:[%s3 + $0xf8] sm:$0xff]
    %v262 = vld [vmem:[%s3 + $0x100] sm:$0xff]
    %v263 = vld [vmem:[%s3 + $0x108] sm:$0xff]
    %v264 = vld [vmem:[%s3 + $0x110] sm:$0xff]
    %v265 = vld [vmem:[%s3 + $0x118] sm:$0xff]
    %v266 = vld [vmem:[%s3 + $0x120] sm:$0xff]
    %v267 = vld [vmem:[%s3 + $0x128] sm:$0xff]
    %v268 = vld [vmem:[%s3 + $0x130] sm:$0xff]
    %v269 = vld [vmem:[%s3 + $0x138] sm:$0xff]
    %v270 = vld [vmem:[%s3 + $0x140] sm:$0xff]
    %v271 = vld [vmem:[%s3 + $0x148] sm:$0xff]
    %v272 = vld [vmem:[%s3 + $0x150] sm:$0xff]
    %v273 = vld [vmem:[%s3 + $0x158] sm:$0xff]
    %v274 = vld [vmem:[%s3 + $0x160] sm:$0xff]
    %v275 = vld [vmem:[%s3 + $0x168] sm:$0xff]
    %v276 = vld [vmem:[%s3 + $0x170] sm:$0xff]
    %v277 = vld [vmem:[%s3 + $0x178] sm:$0xff]
    %v278 = vld [vmem:[%s3 + $0x180] sm:$0xff]
    %v279 = vld [vmem:[%s3 + $0x188] sm:$0xff]
    %v280 = vld [vmem:[%s3 + $0x190] sm:$0xff]
    %v281 = vld [vmem:[%s3 + $0x198] sm:$0xff]
    %v282 = vld [vmem:[%s3 + $0x1a0] sm:$0xff]
    %v283 = vld [vmem:[%s3 + $0x1a8] sm:$0xff]
    %v284 = vld [vmem:[%s3 + $0x1b0] sm:$0xff]
    %v285 = vld [vmem:[%s3 + $0x1b8] sm:$0xff]
    %v286 = vld [vmem:[%s3 + $0x1c0] sm:$0xff]
    %v287 = vld [vmem:[%s3 + $0x1c8] sm:$0xff]
    %v288 = vld [vmem:[%s3 + $0x1d0] sm:$0xff]
    %v289 = vld [vmem:[%s3 + $0x1d8] sm:$0xff]
    %v290 = vld [vmem:[%s3 + $0x1e0] sm:$0xff]
    %v291 = vld [vmem:[%s3 + $0x1e8] sm:$0xff]
    %v292 = vld [vmem:[%s3 + $0x1f0] sm:$0xff]
    %v293 = vld [vmem:[%s3 + $0x1f8] sm:$0xff]
    %v294 = vld [vmem:[%s3 + $0x200] sm:$0xff]
    %v295 = vld [vmem:[%s3 + $0x208] sm:$0xff]
    %v296 = vld [vmem:[%s3 + $0x210] sm:$0xff]
    %v297 = vld [vmem:[%s3 + $0x218] sm:$0xff]
    %v298 = vld [vmem:[%s3 + $0x220] sm:$0xff]
    %v299 = vld [vmem:[%s3 + $0x228] sm:$0xff]
    %v300 = vld [vmem:[%s3 + $0x230] sm:$0xff]
    %v301 = vld [vmem:[%s3 + $0x238] sm:$0xff]
    %v302 = vld [vmem:[%s3 + $0x240] sm:$0xff]
    %v303 = vld [vmem:[%s3 + $0x248] sm:$0xff]
    %v304 = vld [vmem:[%s3 + $0x250] sm:$0xff]
    %v305 = vld [vmem:[%s3 + $0x258] sm:$0xff]
    %v306 = vld [vmem:[%s3 + $0x260] sm:$0xff]
    %v307 = vld [vmem:[%s3 + $0x268] sm:$0xff]
    %v308 = vld [vmem:[%s3 + $0x270] sm:$0xff]
    %v309 = vld [vmem:[%s3 + $0x278] sm:$0xff]
    %v310 = vld [vmem:[%s3 + $0x280] sm:$0xff]
    %v311 = vld [vmem:[%s3 + $0x288] sm:$0xff]
    %v312 = vld [vmem:[%s3 + $0x290] sm:$0xff]
    %v313 = vld [vmem:[%s3 + $0x298] sm:$0xff]
    %v314 = vld [vmem:[%s3 + $0x2a0] sm:$0xff]
    %v315 = vld [vmem:[%s3 + $0x2a8] sm:$0xff]
    %v316 = vld [vmem:[%s3 + $0x2b0] sm:$0xff]
    %v317 = vld [vmem:[%s3 + $0x2b8] sm:$0xff]
    %v318 = vld [vmem:[%s3 + $0x2c0] sm:$0xff]
    %v319 = vld [vmem:[%s3 + $0x2c8] sm:$0xff]
    %v320 = vld [vmem:[%s3 + $0x2d0] sm:$0xff]
    %v321 = vld [vmem:[%s3 + $0x2d8] sm:$0xff]
    %v322 = vld [vmem:[%s3 + $0x2e0] sm:$0xff]
    %v323 = vld [vmem:[%s3 + $0x2e8] sm:$0xff]
    %v324 = vld [vmem:[%s3 + $0x2f0] sm:$0xff]
    %v325 = vld [vmem:[%s3 + $0x2f8] sm:$0xff]
    %v326 = vld [vmem:[%s3 + $0x300] sm:$0xff]
    %v327 = vld [vmem:[%s3 + $0x308] sm:$0xff]
    %v328 = vld [vmem:[%s3 + $0x310] sm:$0xff]
    %v329 = vld [vmem:[%s3 + $0x318] sm:$0xff]
    %v330 = vld [vmem:[%s3 + $0x320] sm:$0xff]
    %v331 = vld [vmem:[%s3 + $0x328] sm:$0xff]
    %v332 = vld [vmem:[%s3 + $0x330] sm:$0xff]
    %v333 = vld [vmem:[%s3 + $0x338] sm:$0xff]
    %v334 = vld [vmem:[%s3 + $0x340] sm:$0xff]
    %v335 = vld [vmem:[%s3 + $0x348] sm:$0xff]
    %v336 = vld [vmem:[%s3 + $0x350] sm:$0xff]
    %v337 = vld [vmem:[%s3 + $0x358] sm:$0xff]
    %v338 = vld [vmem:[%s3 + $0x360] sm:$0xff]
    %v339 = vld [vmem:[%s3 + $0x368] sm:$0xff]
    %v340 = vld [vmem:[%s3 + $0x370] sm:$0xff]
    %v341 = vld [vmem:[%s3 + $0x378] sm:$0xff]
    %v342 = vld [vmem:[%s3 + $0x380] sm:$0xff]
    %v343 = vld [vmem:[%s3 + $0x388] sm:$0xff]
    %v344 = vld [vmem:[%s3 + $0x390] sm:$0xff]
    %v345 = vld [vmem:[%s3 + $0x398] sm:$0xff]
    %v346 = vld [vmem:[%s3 + $0x3a0] sm:$0xff]
    %v347 = vld [vmem:[%s3 + $0x3a8] sm:$0xff]
    %v348 = vld [vmem:[%s3 + $0x3b0] sm:$0xff]
    %v349 = vld [vmem:[%s3 + $0x3b8] sm:$0xff]
    %v350 = vld [vmem:[%s3 + $0x3c0] sm:$0xff]
    %v351 = vld [vmem:[%s3 + $0x3c8] sm:$0xff]
    %v352 = vld [vmem:[%s3 + $0x3d0] sm:$0xff]
    %v353 = vld [vmem:[%s3 + $0x3d8] sm:$0xff]
    %v354 = vld [vmem:[%s3 + $0x3e0] sm:$0xff]
    %v355 = vld [vmem:[%s3 + $0x3e8] sm:$0xff]
    %v356 = vld [vmem:[%s3 + $0x3f0] sm:$0xff]
    %v357 = vld [vmem:[%s3 + $0x3f8] sm:$0xff]
    %v486 = vunpack.c.l.b16 %v230
    %v487 = vunpack.c.h.b16 %v230
    %v488 = vunpack.c.l.b16 %v231
    %v489 = vunpack.c.h.b16 %v231
    %v490 = vunpack.c.l.b16 %v232
    %v491 = vunpack.c.h.b16 %v232
    %v492 = vunpack.c.l.b16 %v233
    %v493 = vunpack.c.h.b16 %v233
    %v494 = vunpack.c.l.b16 %v234
    %v495 = vunpack.c.h.b16 %v234
    %v496 = vunpack.c.l.b16 %v235
    %v497 = vunpack.c.h.b16 %v235
    %v498 = vunpack.c.l.b16 %v236
    %v499 = vunpack.c.h.b16 %v236
    %v500 = vunpack.c.l.b16 %v237
    %v501 = vunpack.c.h.b16 %v237
    %v502 = vunpack.c.l.b16 %v238
    %v503 = vunpack.c.h.b16 %v238
    %v504 = vunpack.c.l.b16 %v239
    %v505 = vunpack.c.h.b16 %v239
    %v506 = vunpack.c.l.b16 %v240
    %v507 = vunpack.c.h.b16 %v240
    %v508 = vunpack.c.l.b16 %v241
    %v509 = vunpack.c.h.b16 %v241
    %v510 = vunpack.c.l.b16 %v242
    %v511 = vunpack.c.h.b16 %v242
    %v512 = vunpack.c.l.b16 %v243
    %v513 = vunpack.c.h.b16 %v243
    %v514 = vunpack.c.l.b16 %v244
    %v515 = vunpack.c.h.b16 %v244
    %v516 = vunpack.c.l.b16 %v245
    %v517 = vunpack.c.h.b16 %v245
    %v518 = vunpack.c.l.b16 %v246
    %v519 = vunpack.c.h.b16 %v246
    %v520 = vunpack.c.l.b16 %v247
    %v521 = vunpack.c.h.b16 %v247
    %v522 = vunpack.c.l.b16 %v248
    %v523 = vunpack.c.h.b16 %v248
    %v524 = vunpack.c.l.b16 %v249
    %v525 = vunpack.c.h.b16 %v249
    %v526 = vunpack.c.l.b16 %v250
    %v527 = vunpack.c.h.b16 %v250
    %v528 = vunpack.c.l.b16 %v251
    %v529 = vunpack.c.h.b16 %v251
    %v530 = vunpack.c.l.b16 %v252
    %v531 = vunpack.c.h.b16 %v252
    %v532 = vunpack.c.l.b16 %v253
    %v533 = vunpack.c.h.b16 %v253
    %v534 = vunpack.c.l.b16 %v254
    %v535 = vunpack.c.h.b16 %v254
    %v536 = vunpack.c.l.b16 %v255
    %v537 = vunpack.c.h.b16 %v255
    %v538 = vunpack.c.l.b16 %v256
    %v539 = vunpack.c.h.b16 %v256
    %v540 = vunpack.c.l.b16 %v257
    %v541 = vunpack.c.h.b16 %v257
    %v542 = vunpack.c.l.b16 %v258
    %v543 = vunpack.c.h.b16 %v258
    %v544 = vunpack.c.l.b16 %v259
    %v545 = vunpack.c.h.b16 %v259
    %v546 = vunpack.c.l.b16 %v260
    %v547 = vunpack.c.h.b16 %v260
    %v548 = vunpack.c.l.b16 %v261
    %v549 = vunpack.c.h.b16 %v261
    %v550 = vunpack.c.l.b16 %v262
    %v551 = vunpack.c.h.b16 %v262
    %v552 = vunpack.c.l.b16 %v263
    %v553 = vunpack.c.h.b16 %v263
    %v554 = vunpack.c.l.b16 %v264
    %v555 = vunpack.c.h.b16 %v264
    %v556 = vunpack.c.l.b16 %v265
    %v557 = vunpack.c.h.b16 %v265
    %v558 = vunpack.c.l.b16 %v266
    %v559 = vunpack.c.h.b16 %v266
    %v560 = vunpack.c.l.b16 %v267
    %v561 = vunpack.c.h.b16 %v267
    %v562 = vunpack.c.l.b16 %v268
    %v563 = vunpack.c.h.b16 %v268
    %v564 = vunpack.c.l.b16 %v269
    %v565 = vunpack.c.h.b16 %v269
    %v566 = vunpack.c.l.b16 %v270
    %v567 = vunpack.c.h.b16 %v270
    %v568 = vunpack.c.l.b16 %v271
    %v569 = vunpack.c.h.b16 %v271
    %v570 = vunpack.c.l.b16 %v272
    %v571 = vunpack.c.h.b16 %v272
    %v572 = vunpack.c.l.b16 %v273
    %v573 = vunpack.c.h.b16 %v273
    %v574 = vunpack.c.l.b16 %v274
    %v575 = vunpack.c.h.b16 %v274
    %v576 = vunpack.c.l.b16 %v275
    %v577 = vunpack.c.h.b16 %v275
    %v578 = vunpack.c.l.b16 %v276
    %v579 = vunpack.c.h.b16 %v276
    %v580 = vunpack.c.l.b16 %v277
    %v581 = vunpack.c.h.b16 %v277
    %v582 = vunpack.c.l.b16 %v278
    %v583 = vunpack.c.h.b16 %v278
    %v584 = vunpack.c.l.b16 %v279
    %v585 = vunpack.c.h.b16 %v279
    %v586 = vunpack.c.l.b16 %v280
    %v587 = vunpack.c.h.b16 %v280
    %v588 = vunpack.c.l.b16 %v281
    %v589 = vunpack.c.h.b16 %v281
    %v590 = vunpack.c.l.b16 %v282
    %v591 = vunpack.c.h.b16 %v282
    %v592 = vunpack.c.l.b16 %v283
    %v593 = vunpack.c.h.b16 %v283
    %v594 = vunpack.c.l.b16 %v284
    %v595 = vunpack.c.h.b16 %v284
    %v596 = vunpack.c.l.b16 %v285
    %v597 = vunpack.c.h.b16 %v285
    %v598 = vunpack.c.l.b16 %v286
    %v599 = vunpack.c.h.b16 %v286
    %v600 = vunpack.c.l.b16 %v287
    %v601 = vunpack.c.h.b16 %v287
    %v602 = vunpack.c.l.b16 %v288
    %v603 = vunpack.c.h.b16 %v288
    %v604 = vunpack.c.l.b16 %v289
    %v605 = vunpack.c.h.b16 %v289
    %v606 = vunpack.c.l.b16 %v290
    %v607 = vunpack.c.h.b16 %v290
    %v608 = vunpack.c.l.b16 %v291
    %v609 = vunpack.c.h.b16 %v291
    %v610 = vunpack.c.l.b16 %v292
    %v611 = vunpack.c.h.b16 %v292
    %v612 = vunpack.c.l.b16 %v293
    %v613 = vunpack.c.h.b16 %v293
    %v614 = vunpack.c.l.b16 %v294
    %v615 = vunpack.c.h.b16 %v294
    %v616 = vunpack.c.l.b16 %v295
    %v617 = vunpack.c.h.b16 %v295
    %v618 = vunpack.c.l.b16 %v296
    %v619 = vunpack.c.h.b16 %v296
    %v620 = vunpack.c.l.b16 %v297
    %v621 = vunpack.c.h.b16 %v297
    %v622 = vunpack.c.l.b16 %v298
    %v623 = vunpack.c.h.b16 %v298
    %v624 = vunpack.c.l.b16 %v299
    %v625 = vunpack.c.h.b16 %v299
    %v626 = vunpack.c.l.b16 %v300
    %v627 = vunpack.c.h.b16 %v300
    %v628 = vunpack.c.l.b16 %v301
    %v629 = vunpack.c.h.b16 %v301
    %v630 = vunpack.c.l.b16 %v302
    %v631 = vunpack.c.h.b16 %v302
    %v632 = vunpack.c.l.b16 %v303
    %v633 = vunpack.c.h.b16 %v303
    %v634 = vunpack.c.l.b16 %v304
    %v635 = vunpack.c.h.b16 %v304
    %v636 = vunpack.c.l.b16 %v305
    %v637 = vunpack.c.h.b16 %v305
    %v638 = vunpack.c.l.b16 %v306
    %v639 = vunpack.c.h.b16 %v306
    %v640 = vunpack.c.l.b16 %v307
    %v641 = vunpack.c.h.b16 %v307
    %v642 = vunpack.c.l.b16 %v308
    %v643 = vunpack.c.h.b16 %v308
    %v644 = vunpack.c.l.b16 %v309
    %v645 = vunpack.c.h.b16 %v309
    %v646 = vunpack.c.l.b16 %v310
    %v647 = vunpack.c.h.b16 %v310
    %v648 = vunpack.c.l.b16 %v311
    %v649 = vunpack.c.h.b16 %v311
    %v650 = vunpack.c.l.b16 %v312
    %v651 = vunpack.c.h.b16 %v312
    %v652 = vunpack.c.l.b16 %v313
    %v653 = vunpack.c.h.b16 %v313
    %v654 = vunpack.c.l.b16 %v314
    %v655 = vunpack.c.h.b16 %v314
    %v656 = vunpack.c.l.b16 %v315
    %v657 = vunpack.c.h.b16 %v315
    %v658 = vunpack.c.l.b16 %v316
    %v659 = vunpack.c.h.b16 %v316
    %v660 = vunpack.c.l.b16 %v317
    %v661 = vunpack.c.h.b16 %v317
    %v662 = vunpack.c.l.b16 %v318
    %v663 = vunpack.c.h.b16 %v318
    %v664 = vunpack.c.l.b16 %v319
    %v665 = vunpack.c.h.b16 %v319
    %v666 = vunpack.c.l.b16 %v320
    %v667 = vunpack.c.h.b16 %v320
    %v668 = vunpack.c.l.b16 %v321
    %v669 = vunpack.c.h.b16 %v321
    %v670 = vunpack.c.l.b16 %v322
    %v671 = vunpack.c.h.b16 %v322
    %v672 = vunpack.c.l.b16 %v323
    %v673 = vunpack.c.h.b16 %v323
    %v674 = vunpack.c.l.b16 %v324
    %v675 = vunpack.c.h.b16 %v324
    %v676 = vunpack.c.l.b16 %v325
    %v677 = vunpack.c.h.b16 %v325
    %v678 = vunpack.c.l.b16 %v326
    %v679 = vunpack.c.h.b16 %v326
    %v680 = vunpack.c.l.b16 %v327
    %v681 = vunpack.c.h.b16 %v327
    %v682 = vunpack.c.l.b16 %v328
    %v683 = vunpack.c.h.b16 %v328
    %v684 = vunpack.c.l.b16 %v329
    %v685 = vunpack.c.h.b16 %v329
    %v686 = vunpack.c.l.b16 %v330
    %v687 = vunpack.c.h.b16 %v330
    %v688 = vunpack.c.l.b16 %v331
    %v689 = vunpack.c.h.b16 %v331
    %v690 = vunpack.c.l.b16 %v332
    %v691 = vunpack.c.h.b16 %v332
    %v692 = vunpack.c.l.b16 %v333
    %v693 = vunpack.c.h.b16 %v333
    %v694 = vunpack.c.l.b16 %v334
    %v695 = vunpack.c.h.b16 %v334
    %v696 = vunpack.c.l.b16 %v335
    %v697 = vunpack.c.h.b16 %v335
    %v698 = vunpack.c.l.b16 %v336
    %v699 = vunpack.c.h.b16 %v336
    %v700 = vunpack.c.l.b16 %v337
    %v701 = vunpack.c.h.b16 %v337
    %v702 = vunpack.c.l.b16 %v338
    %v703 = vunpack.c.h.b16 %v338
    %v704 = vunpack.c.l.b16 %v339
    %v705 = vunpack.c.h.b16 %v339
    %v706 = vunpack.c.l.b16 %v340
    %v707 = vunpack.c.h.b16 %v340
    %v708 = vunpack.c.l.b16 %v341
    %v709 = vunpack.c.h.b16 %v341
    %v710 = vunpack.c.l.b16 %v342
    %v711 = vunpack.c.h.b16 %v342
    %v712 = vunpack.c.l.b16 %v343
    %v713 = vunpack.c.h.b16 %v343
    %v714 = vunpack.c.l.b16 %v344
    %v715 = vunpack.c.h.b16 %v344
    %v716 = vunpack.c.l.b16 %v345
    %v717 = vunpack.c.h.b16 %v345
    %v718 = vunpack.c.l.b16 %v346
    %v719 = vunpack.c.h.b16 %v346
    %v720 = vunpack.c.l.b16 %v347
    %v721 = vunpack.c.h.b16 %v347
    %v722 = vunpack.c.l.b16 %v348
    %v723 = vunpack.c.h.b16 %v348
    %v724 = vunpack.c.l.b16 %v349
    %v725 = vunpack.c.h.b16 %v349
    %v726 = vunpack.c.l.b16 %v350
    %v727 = vunpack.c.h.b16 %v350
    %v728 = vunpack.c.l.b16 %v351
    %v729 = vunpack.c.h.b16 %v351
    %v730 = vunpack.c.l.b16 %v352
    %v731 = vunpack.c.h.b16 %v352
    %v732 = vunpack.c.l.b16 %v353
    %v733 = vunpack.c.h.b16 %v353
    %v734 = vunpack.c.l.b16 %v354
    %v735 = vunpack.c.h.b16 %v354
    %v736 = vunpack.c.l.b16 %v355
    %v737 = vunpack.c.h.b16 %v355
    %v738 = vunpack.c.l.b16 %v356
    %v739 = vunpack.c.h.b16 %v356
    %v740 = vunpack.c.l.b16 %v357
    %v741 = vunpack.c.h.b16 %v357
    %v742 = vpack.c.b16 %v490, %v486
    %v743 = vpack.c.b16 %v491, %v487
    %v744 = vpack.c.b16 %v492, %v488
    %v745 = vpack.c.b16 %v493, %v489
    %v746 = vpack.c.b16 %v498, %v494
    %v747 = vpack.c.b16 %v499, %v495
    %v748 = vpack.c.b16 %v500, %v496
    %v749 = vpack.c.b16 %v501, %v497
    %v750 = vpack.c.b16 %v506, %v502
    %v751 = vpack.c.b16 %v507, %v503
    %v752 = vpack.c.b16 %v508, %v504
    %v753 = vpack.c.b16 %v509, %v505
    %v754 = vpack.c.b16 %v514, %v510
    %v755 = vpack.c.b16 %v515, %v511
    %v756 = vpack.c.b16 %v516, %v512
    %v757 = vpack.c.b16 %v517, %v513
    %v758 = vpack.c.b16 %v522, %v518
    %v759 = vpack.c.b16 %v523, %v519
    %v760 = vpack.c.b16 %v524, %v520
    %v761 = vpack.c.b16 %v525, %v521
    %v762 = vpack.c.b16 %v530, %v526
    %v763 = vpack.c.b16 %v531, %v527
    %v764 = vpack.c.b16 %v532, %v528
    %v765 = vpack.c.b16 %v533, %v529
    %v766 = vpack.c.b16 %v538, %v534
    %v767 = vpack.c.b16 %v539, %v535
    %v768 = vpack.c.b16 %v540, %v536
    %v769 = vpack.c.b16 %v541, %v537
    %v770 = vpack.c.b16 %v546, %v542
    %v771 = vpack.c.b16 %v547, %v543
    %v772 = vpack.c.b16 %v548, %v544
    %v773 = vpack.c.b16 %v549, %v545
    %v774 = vpack.c.b16 %v554, %v550
    %v775 = vpack.c.b16 %v555, %v551
    %v776 = vpack.c.b16 %v556, %v552
    %v777 = vpack.c.b16 %v557, %v553
    %v778 = vpack.c.b16 %v562, %v558
    %v779 = vpack.c.b16 %v563, %v559
    %v780 = vpack.c.b16 %v564, %v560
    %v781 = vpack.c.b16 %v565, %v561
    %v782 = vpack.c.b16 %v570, %v566
    %v783 = vpack.c.b16 %v571, %v567
    %v784 = vpack.c.b16 %v572, %v568
    %v785 = vpack.c.b16 %v573, %v569
    %v786 = vpack.c.b16 %v578, %v574
    %v787 = vpack.c.b16 %v579, %v575
    %v788 = vpack.c.b16 %v580, %v576
    %v789 = vpack.c.b16 %v581, %v577
    %v790 = vpack.c.b16 %v586, %v582
    %v791 = vpack.c.b16 %v587, %v583
    %v792 = vpack.c.b16 %v588, %v584
    %v793 = vpack.c.b16 %v589, %v585
    %v794 = vpack.c.b16 %v594, %v590
    %v795 = vpack.c.b16 %v595, %v591
    %v796 = vpack.c.b16 %v596, %v592
    %v797 = vpack.c.b16 %v597, %v593
    %v798 = vpack.c.b16 %v602, %v598
    %v799 = vpack.c.b16 %v603, %v599
    %v800 = vpack.c.b16 %v604, %v600
    %v801 = vpack.c.b16 %v605, %v601
    %v802 = vpack.c.b16 %v610, %v606
    %v803 = vpack.c.b16 %v611, %v607
    %v804 = vpack.c.b16 %v612, %v608
    %v805 = vpack.c.b16 %v613, %v609
    %v806 = vpack.c.b16 %v618, %v614
    %v807 = vpack.c.b16 %v619, %v615
    %v808 = vpack.c.b16 %v620, %v616
    %v809 = vpack.c.b16 %v621, %v617
    %v810 = vpack.c.b16 %v626, %v622
    %v811 = vpack.c.b16 %v627, %v623
    %v812 = vpack.c.b16 %v628, %v624
    %v813 = vpack.c.b16 %v629, %v625
    %v814 = vpack.c.b16 %v634, %v630
    %v815 = vpack.c.b16 %v635, %v631
    %v816 = vpack.c.b16 %v636, %v632
    %v817 = vpack.c.b16 %v637, %v633
    %v818 = vpack.c.b16 %v642, %v638
    %v819 = vpack.c.b16 %v643, %v639
    %v820 = vpack.c.b16 %v644, %v640
    %v821 = vpack.c.b16 %v645, %v641
    %v822 = vpack.c.b16 %v650, %v646
    %v823 = vpack.c.b16 %v651, %v647
    %v824 = vpack.c.b16 %v652, %v648
    %v825 = vpack.c.b16 %v653, %v649
    %v826 = vpack.c.b16 %v658, %v654
    %v827 = vpack.c.b16 %v659, %v655
    %v828 = vpack.c.b16 %v660, %v656
    %v829 = vpack.c.b16 %v661, %v657
    %v830 = vpack.c.b16 %v666, %v662
    %v831 = vpack.c.b16 %v667, %v663
    %v832 = vpack.c.b16 %v668, %v664
    %v833 = vpack.c.b16 %v669, %v665
    %v834 = vpack.c.b16 %v674, %v670
    %v835 = vpack.c.b16 %v675, %v671
    %v836 = vpack.c.b16 %v676, %v672
    %v837 = vpack.c.b16 %v677, %v673
    %v838 = vpack.c.b16 %v682, %v678
    %v839 = vpack.c.b16 %v683, %v679
    %v840 = vpack.c.b16 %v684, %v680
    %v841 = vpack.c.b16 %v685, %v681
    %v842 = vpack.c.b16 %v690, %v686
    %v843 = vpack.c.b16 %v691, %v687
    %v844 = vpack.c.b16 %v692, %v688
    %v845 = vpack.c.b16 %v693, %v689
    %v846 = vpack.c.b16 %v698, %v694
    %v847 = vpack.c.b16 %v699, %v695
    %v848 = vpack.c.b16 %v700, %v696
    %v849 = vpack.c.b16 %v701, %v697
    %v850 = vpack.c.b16 %v706, %v702
    %v851 = vpack.c.b16 %v707, %v703
    %v852 = vpack.c.b16 %v708, %v704
    %v853 = vpack.c.b16 %v709, %v705
    %v854 = vpack.c.b16 %v714, %v710
    %v855 = vpack.c.b16 %v715, %v711
    %v856 = vpack.c.b16 %v716, %v712
    %v857 = vpack.c.b16 %v717, %v713
    %v858 = vpack.c.b16 %v722, %v718
    %v859 = vpack.c.b16 %v723, %v719
    %v860 = vpack.c.b16 %v724, %v720
    %v861 = vpack.c.b16 %v725, %v721
    %v862 = vpack.c.b16 %v730, %v726
    %v863 = vpack.c.b16 %v731, %v727
    %v864 = vpack.c.b16 %v732, %v728
    %v865 = vpack.c.b16 %v733, %v729
    %v866 = vpack.c.b16 %v738, %v734
    %v867 = vpack.c.b16 %v739, %v735
    %v868 = vpack.c.b16 %v740, %v736
    %v869 = vpack.c.b16 %v741, %v737
    %998 = vmatprep.subr.bf16.mxu0 %v771
    %999 = vmatpush1.bf16.msra.mxu0 %v770
    %1000 = vmatprep.subr.bf16.mxu0 %v767
    %1001 = vmatpush1.bf16.msra.mxu0 %v766
    %1002 = vmatprep.subr.bf16.mxu0 %v763
    %1003 = vmatpush1.bf16.msra.mxu0 %v762
    %1004 = vmatprep.subr.bf16.mxu0 %v759
    %1005 = vmatpush1.bf16.msra.mxu0 %v758
    %1006 = vmatprep.subr.bf16.mxu0 %v755
    %1007 = vmatpush1.bf16.msra.mxu0 %v754
    %1008 = vmatprep.subr.bf16.mxu0 %v751
    %1009 = vmatpush1.bf16.msra.mxu0 %v750
    %1010 = vmatprep.subr.bf16.mxu0 %v747
    %1011 = vmatpush1.bf16.msra.mxu0 %v746
    %1012 = vmatprep.subr.bf16.mxu0 %v743
    %1013 = vmatpush1.bf16.msra.mxu0 %v742
    %1014 = vmatprep.subr.bf16.mxu0 %v803
    %1015 = vmatpush2.bf16.msra.mxu0 %v802
    %1016 = vmatprep.subr.bf16.mxu0 %v799
    %1017 = vmatpush2.bf16.msra.mxu0 %v798
    %1018 = vmatprep.subr.bf16.mxu0 %v795
    %1019 = vmatpush2.bf16.msra.mxu0 %v794
    %1020 = vmatprep.subr.bf16.mxu0 %v791
    %1021 = vmatpush2.bf16.msra.mxu0 %v790
    %1022 = vmatprep.subr.bf16.mxu0 %v787
    %1023 = vmatpush2.bf16.msra.mxu0 %v786
    %1024 = vmatprep.subr.bf16.mxu0 %v783
    %1025 = vmatpush2.bf16.msra.mxu0 %v782
    %1026 = vmatprep.subr.bf16.mxu0 %v779
    %1027 = vmatpush2.bf16.msra.mxu0 %v778
    %1028 = vmatprep.subr.bf16.mxu0 %v775
    %1029 = vmatpush2.bf16.msra.mxu0 %v774
    %1030 = vmatprep.mubr.bf16.mxu0 %v227
    %1031 = vmatmul.mubr.bf16.gmra.mxu0 %v226
    %v1032 = vpop.f32.mrf.mxu0
    %v1033 = vadd.f32 0.0, %v1032
    %v1034 = vpop.f32.mrf.mxu0
    %v1035 = vadd.f32 0.0, %v1034
    %v1036 = vpop.f32.mrf.mxu0
    %v1037 = vpop.f32.mrf.mxu0
    %1038 = vdwg.mxu0
    %1039 = vmatprep.subr.bf16.mxu0 %v835
    %1040 = vmatpush1.bf16.msra.mxu0 %v834
    %1041 = vmatprep.subr.bf16.mxu0 %v831
    %1042 = vmatpush1.bf16.msra.mxu0 %v830
    %1043 = vmatprep.subr.bf16.mxu0 %v827
    %1044 = vmatpush1.bf16.msra.mxu0 %v826
    %1045 = vmatprep.subr.bf16.mxu0 %v823
    %1046 = vmatpush1.bf16.msra.mxu0 %v822
    %1047 = vmatprep.subr.bf16.mxu0 %v819
    %1048 = vmatpush1.bf16.msra.mxu0 %v818
    %1049 = vmatprep.subr.bf16.mxu0 %v815
    %1050 = vmatpush1.bf16.msra.mxu0 %v814
    %1051 = vmatprep.subr.bf16.mxu0 %v811
    %1052 = vmatpush1.bf16.msra.mxu0 %v810
    %1053 = vmatprep.subr.bf16.mxu0 %v807
    %1054 = vmatpush1.bf16.msra.mxu0 %v806
    %1055 = vmatprep.subr.bf16.mxu0 %v867
    %1056 = vmatpush2.bf16.msra.mxu0 %v866
    %1057 = vmatprep.subr.bf16.mxu0 %v863
    %1058 = vmatpush2.bf16.msra.mxu0 %v862
    %1059 = vmatprep.subr.bf16.mxu0 %v859
    %1060 = vmatpush2.bf16.msra.mxu0 %v858
    %1061 = vmatprep.subr.bf16.mxu0 %v855
    %1062 = vmatpush2.bf16.msra.mxu0 %v854
    %1063 = vmatprep.subr.bf16.mxu0 %v851
    %1064 = vmatpush2.bf16.msra.mxu0 %v850
    %1065 = vmatprep.subr.bf16.mxu0 %v847
    %1066 = vmatpush2.bf16.msra.mxu0 %v846
    %1067 = vmatprep.subr.bf16.mxu0 %v843
    %1068 = vmatpush2.bf16.msra.mxu0 %v842
    %1069 = vmatprep.subr.bf16.mxu0 %v839
    %1070 = vmatpush2.bf16.msra.mxu0 %v838
    %1071 = vmatprep.mubr.bf16.mxu0 %v229
    %1072 = vmatmul.mubr.bf16.gmra.mxu0 %v228
    %v1073 = vpop.f32.mrf.mxu0
    %v1074 = vadd.f32 %v1033, %v1073
    %v1075 = vpop.f32.mrf.mxu0
    %v1076 = vadd.f32 %v1035, %v1075
    %v1077 = vpop.f32.mrf.mxu0
    %v1078 = vpop.f32.mrf.mxu0
    %1079 = vdwg.mxu0
    %1080 = vmatprep.subr.bf16.mxu0 %v773
    %1081 = vmatpush1.bf16.msra.mxu0 %v772
    %1082 = vmatprep.subr.bf16.mxu0 %v769
    %1083 = vmatpush1.bf16.msra.mxu0 %v768
    %1084 = vmatprep.subr.bf16.mxu0 %v765
    %1085 = vmatpush1.bf16.msra.mxu0 %v764
    %1086 = vmatprep.subr.bf16.mxu0 %v761
    %1087 = vmatpush1.bf16.msra.mxu0 %v760
    %1088 = vmatprep.subr.bf16.mxu0 %v757
    %1089 = vmatpush1.bf16.msra.mxu0 %v756
    %1090 = vmatprep.subr.bf16.mxu0 %v753
    %1091 = vmatpush1.bf16.msra.mxu0 %v752
    %1092 = vmatprep.subr.bf16.mxu0 %v749
    %1093 = vmatpush1.bf16.msra.mxu0 %v748
    %1094 = vmatprep.subr.bf16.mxu0 %v745
    %1095 = vmatpush1.bf16.msra.mxu0 %v744
    %1096 = vmatprep.subr.bf16.mxu0 %v805
    %1097 = vmatpush2.bf16.msra.mxu0 %v804
    %1098 = vmatprep.subr.bf16.mxu0 %v801
    %1099 = vmatpush2.bf16.msra.mxu0 %v800
    %1100 = vmatprep.subr.bf16.mxu0 %v797
    %1101 = vmatpush2.bf16.msra.mxu0 %v796
    %1102 = vmatprep.subr.bf16.mxu0 %v793
    %1103 = vmatpush2.bf16.msra.mxu0 %v792
    %1104 = vmatprep.subr.bf16.mxu0 %v789
    %1105 = vmatpush2.bf16.msra.mxu0 %v788
    %1106 = vmatprep.subr.bf16.mxu0 %v785
    %1107 = vmatpush2.bf16.msra.mxu0 %v784
    %1108 = vmatprep.subr.bf16.mxu0 %v781
    %1109 = vmatpush2.bf16.msra.mxu0 %v780
    %1110 = vmatprep.subr.bf16.mxu0 %v777
    %1111 = vmatpush2.bf16.msra.mxu0 %v776
    %1112 = vmatprep.mubr.bf16.mxu0 %v227
    %1113 = vmatmul.mubr.bf16.gmra.mxu0 %v226
    %v1114 = vpop.f32.mrf.mxu0
    %v1115 = vadd.f32 0.0, %v1114
    %v1116 = vpop.f32.mrf.mxu0
    %v1117 = vadd.f32 0.0, %v1116
    %v1118 = vpop.f32.mrf.mxu0
    %v1119 = vpop.f32.mrf.mxu0
    %1120 = vdwg.mxu0
    %1121 = vmatprep.subr.bf16.mxu0 %v837
    %1122 = vmatpush1.bf16.msra.mxu0 %v836
    %1123 = vmatprep.subr.bf16.mxu0 %v833
    %1124 = vmatpush1.bf16.msra.mxu0 %v832
    %1125 = vmatprep.subr.bf16.mxu0 %v829
    %1126 = vmatpush1.bf16.msra.mxu0 %v828
    %1127 = vmatprep.subr.bf16.mxu0 %v825
    %1128 = vmatpush1.bf16.msra.mxu0 %v824
    %1129 = vmatprep.subr.bf16.mxu0 %v821
    %1130 = vmatpush1.bf16.msra.mxu0 %v820
    %1131 = vmatprep.subr.bf16.mxu0 %v817
    %1132 = vmatpush1.bf16.msra.mxu0 %v816
    %1133 = vmatprep.subr.bf16.mxu0 %v813
    %1134 = vmatpush1.bf16.msra.mxu0 %v812
    %1135 = vmatprep.subr.bf16.mxu0 %v809
    %1136 = vmatpush1.bf16.msra.mxu0 %v808
    %1137 = vmatprep.subr.bf16.mxu0 %v869
    %1138 = vmatpush2.bf16.msra.mxu0 %v868
    %1139 = vmatprep.subr.bf16.mxu0 %v865
    %1140 = vmatpush2.bf16.msra.mxu0 %v864
    %1141 = vmatprep.subr.bf16.mxu0 %v861
    %1142 = vmatpush2.bf16.msra.mxu0 %v860
    %1143 = vmatprep.subr.bf16.mxu0 %v857
    %1144 = vmatpush2.bf16.msra.mxu0 %v856
    %1145 = vmatprep.subr.bf16.mxu0 %v853
    %1146 = vmatpush2.bf16.msra.mxu0 %v852
    %1147 = vmatprep.subr.bf16.mxu0 %v849
    %1148 = vmatpush2.bf16.msra.mxu0 %v848
    %1149 = vmatprep.subr.bf16.mxu0 %v845
    %1150 = vmatpush2.bf16.msra.mxu0 %v844
    %1151 = vmatprep.subr.bf16.mxu0 %v841
    %1152 = vmatpush2.bf16.msra.mxu0 %v840
    %1153 = vmatprep.mubr.bf16.mxu0 %v229
    %1154 = vmatmul.mubr.bf16.gmra.mxu0 %v228
    %v1155 = vpop.f32.mrf.mxu0
    %v1156 = vadd.f32 %v1115, %v1155
    %v1157 = vpop.f32.mrf.mxu0
    %v1158 = vadd.f32 %v1117, %v1157
    %v1159 = vpop.f32.mrf.mxu0
    %v1160 = vpop.f32.mrf.mxu0
    %1161 = vdwg.mxu0
    %v1162 = vpack.c.bf16 %v1074, %v1074
    %v1163 = vpack.c.bf16 %v1076, %v1076
    %v1164 = vpack.c.bf16 %v1156, %v1156
    %v1165 = vpack.c.bf16 %v1158, %v1158
    %v1166 = vld [vmem:[%s4] sm:$0xf]
    %v1168 = vlaneseq
    %v1169 = vshrl.u32 %v1168, 7
    %v1170 = vsub.s32 0, %v1169
    %v1171 = vrot.slane %v1166, %v1170
    %v1172 = vlaneseq
    %v1173 = vshrl.u32 %v1172, 7
    %v1174 = vsub.s32 1, %v1173
    %v1175 = vrot.slane %v1166, %v1174
    %v1176 = vlaneseq
    %v1177 = vshrl.u32 %v1176, 7
    %v1178 = vsub.s32 2, %v1177
    %v1179 = vrot.slane %v1166, %v1178
    %v1180 = vlaneseq
    %v1181 = vshrl.u32 %v1180, 7
    %v1182 = vsub.s32 3, %v1181
    %v1183 = vrot.slane %v1166, %v1182
    %v1188 = vpack.c.bf16 %v1171, %v1171
    %v1189 = vpack.c.bf16 %v1175, %v1175
    %v1190 = vpack.c.bf16 %v1179, %v1179
    %v1191 = vpack.c.bf16 %v1183, %v1183
    %v1193 = vpack.i.b16 %v1188, %v1188
    %v1195 = vlaneseq
    %v1196 = vshrl.u32 %v1195, 7
    %v1197 = vsub.s32 0, %v1196
    %v1198 = vrot.slane %v1193, %v1197
    %v1200 = vpack.i.b16 %v1189, %v1189
    %v1202 = vlaneseq
    %v1203 = vshrl.u32 %v1202, 7
    %v1204 = vsub.s32 0, %v1203
    %v1205 = vrot.slane %v1200, %v1204
    %v1207 = vpack.i.b16 %v1190, %v1190
    %v1209 = vlaneseq
    %v1210 = vshrl.u32 %v1209, 7
    %v1211 = vsub.s32 0, %v1210
    %v1212 = vrot.slane %v1207, %v1211
    %v1214 = vpack.i.b16 %v1191, %v1191
    %v1216 = vlaneseq
    %v1217 = vshrl.u32 %v1216, 7
    %v1218 = vsub.s32 0, %v1217
    %v1219 = vrot.slane %v1214, %v1218
    %v1220 = vadd.bf16 %v1162, %v1198
    %v1221 = vadd.bf16 %v1163, %v1205
    %v1222 = vadd.bf16 %v1164, %v1212
    %v1223 = vadd.bf16 %v1165, %v1219
    %v1224 = vmax.bf16 %v1220, 0
    %v1225 = vmax.bf16 %v1221, 0
    %v1226 = vmax.bf16 %v1222, 0
    %v1227 = vmax.bf16 %v1223, 0
    %v1228 = vld [vmem:[%s5] sm:$0xff]
    %v1229 = vld [vmem:[%s5 + $0x8] sm:$0xff]
    %v1230 = vld [vmem:[%s5 + $0x10] sm:$0xff]
    %v1231 = vld [vmem:[%s5 + $0x18] sm:$0xf]
    %v1232 = vld [vmem:[%s5 + $0x1c] sm:$0xff]
    %v1233 = vld [vmem:[%s5 + $0x24] sm:$0xff]
    %v1234 = vld [vmem:[%s5 + $0x2c] sm:$0xff]
    %v1235 = vld [vmem:[%s5 + $0x34] sm:$0xf]
    %v1236 = vld [vmem:[%s5 + $0x38] sm:$0xff]
    %v1237 = vld [vmem:[%s5 + $0x40] sm:$0xff]
    %v1238 = vld [vmem:[%s5 + $0x48] sm:$0xff]
    %v1239 = vld [vmem:[%s5 + $0x50] sm:$0xf]
    %v1240 = vld [vmem:[%s5 + $0x54] sm:$0xff]
    %v1241 = vld [vmem:[%s5 + $0x5c] sm:$0xff]
    %v1242 = vld [vmem:[%s5 + $0x64] sm:$0xff]
    %v1243 = vld [vmem:[%s5 + $0x6c] sm:$0xf]
    %v1244 = vld [vmem:[%s5 + $0x70] sm:$0xff]
    %v1245 = vld [vmem:[%s5 + $0x78] sm:$0xff]
    %v1246 = vld [vmem:[%s5 + $0x80] sm:$0xff]
    %v1247 = vld [vmem:[%s5 + $0x88] sm:$0xf]
    %v1248 = vld [vmem:[%s5 + $0x8c] sm:$0xff]
    %v1249 = vld [vmem:[%s5 + $0x94] sm:$0xff]
    %v1250 = vld [vmem:[%s5 + $0x9c] sm:$0xff]
    %v1251 = vld [vmem:[%s5 + $0xa4] sm:$0xf]
    %v1252 = vld [vmem:[%s5 + $0xa8] sm:$0xff]
    %v1253 = vld [vmem:[%s5 + $0xb0] sm:$0xff]
    %v1254 = vld [vmem:[%s5 + $0xb8] sm:$0xff]
    %v1255 = vld [vmem:[%s5 + $0xc0] sm:$0xf]
    %v1256 = vld [vmem:[%s5 + $0xc4] sm:$0xff]
    %v1257 = vld [vmem:[%s5 + $0xcc] sm:$0xff]
    %v1258 = vld [vmem:[%s5 + $0xd4] sm:$0xff]
    %v1259 = vld [vmem:[%s5 + $0xdc] sm:$0xf]
    %v1260 = vld [vmem:[%s5 + $0xe0] sm:$0xff]
    %v1261 = vld [vmem:[%s5 + $0xe8] sm:$0xff]
    %v1262 = vld [vmem:[%s5 + $0xf0] sm:$0xff]
    %v1263 = vld [vmem:[%s5 + $0xf8] sm:$0xf]
    %v1264 = vld [vmem:[%s5 + $0xfc] sm:$0xff]
    %v1265 = vld [vmem:[%s5 + $0x104] sm:$0xff]
    %v1266 = vld [vmem:[%s5 + $0x10c] sm:$0xff]
    %v1267 = vld [vmem:[%s5 + $0x114] sm:$0xf]
    %v1268 = vld [vmem:[%s5 + $0x118] sm:$0xff]
    %v1269 = vld [vmem:[%s5 + $0x120] sm:$0xff]
    %v1270 = vld [vmem:[%s5 + $0x128] sm:$0xff]
    %v1271 = vld [vmem:[%s5 + $0x130] sm:$0xf]
    %v1272 = vld [vmem:[%s5 + $0x134] sm:$0xff]
    %v1273 = vld [vmem:[%s5 + $0x13c] sm:$0xff]
    %v1274 = vld [vmem:[%s5 + $0x144] sm:$0xff]
    %v1275 = vld [vmem:[%s5 + $0x14c] sm:$0xf]
    %v1276 = vld [vmem:[%s5 + $0x150] sm:$0xff]
    %v1277 = vld [vmem:[%s5 + $0x158] sm:$0xff]
    %v1278 = vld [vmem:[%s5 + $0x160] sm:$0xff]
    %v1279 = vld [vmem:[%s5 + $0x168] sm:$0xf]
    %v1280 = vld [vmem:[%s5 + $0x16c] sm:$0xff]
    %v1281 = vld [vmem:[%s5 + $0x174] sm:$0xff]
    %v1282 = vld [vmem:[%s5 + $0x17c] sm:$0xff]
    %v1283 = vld [vmem:[%s5 + $0x184] sm:$0xf]
    %v1284 = vld [vmem:[%s5 + $0x188] sm:$0xff]
    %v1285 = vld [vmem:[%s5 + $0x190] sm:$0xff]
    %v1286 = vld [vmem:[%s5 + $0x198] sm:$0xff]
    %v1287 = vld [vmem:[%s5 + $0x1a0] sm:$0xf]
    %v1288 = vld [vmem:[%s5 + $0x1a4] sm:$0xff]
    %v1289 = vld [vmem:[%s5 + $0x1ac] sm:$0xff]
    %v1290 = vld [vmem:[%s5 + $0x1b4] sm:$0xff]
    %v1291 = vld [vmem:[%s5 + $0x1bc] sm:$0xf]
    %v1292 = vld [vmem:[%s5 + $0x1c0] sm:$0xff]
    %v1293 = vld [vmem:[%s5 + $0x1c8] sm:$0xff]
    %v1294 = vld [vmem:[%s5 + $0x1d0] sm:$0xff]
    %v1295 = vld [vmem:[%s5 + $0x1d8] sm:$0xf]
    %v1296 = vld [vmem:[%s5 + $0x1dc] sm:$0xff]
    %v1297 = vld [vmem:[%s5 + $0x1e4] sm:$0xff]
    %v1298 = vld [vmem:[%s5 + $0x1ec] sm:$0xff]
    %v1299 = vld [vmem:[%s5 + $0x1f4] sm:$0xf]
    %v1300 = vld [vmem:[%s5 + $0x1f8] sm:$0xff]
    %v1301 = vld [vmem:[%s5 + $0x200] sm:$0xff]
    %v1302 = vld [vmem:[%s5 + $0x208] sm:$0xff]
    %v1303 = vld [vmem:[%s5 + $0x210] sm:$0xf]
    %v1304 = vld [vmem:[%s5 + $0x214] sm:$0xff]
    %v1305 = vld [vmem:[%s5 + $0x21c] sm:$0xff]
    %v1306 = vld [vmem:[%s5 + $0x224] sm:$0xff]
    %v1307 = vld [vmem:[%s5 + $0x22c] sm:$0xf]
    %v1308 = vld [vmem:[%s5 + $0x230] sm:$0xff]
    %v1309 = vld [vmem:[%s5 + $0x238] sm:$0xff]
    %v1310 = vld [vmem:[%s5 + $0x240] sm:$0xff]
    %v1311 = vld [vmem:[%s5 + $0x248] sm:$0xf]
    %v1312 = vld [vmem:[%s5 + $0x24c] sm:$0xff]
    %v1313 = vld [vmem:[%s5 + $0x254] sm:$0xff]
    %v1314 = vld [vmem:[%s5 + $0x25c] sm:$0xff]
    %v1315 = vld [vmem:[%s5 + $0x264] sm:$0xf]
    %v1316 = vld [vmem:[%s5 + $0x268] sm:$0xff]
    %v1317 = vld [vmem:[%s5 + $0x270] sm:$0xff]
    %v1318 = vld [vmem:[%s5 + $0x278] sm:$0xff]
    %v1319 = vld [vmem:[%s5 + $0x280] sm:$0xf]
    %v1320 = vld [vmem:[%s5 + $0x284] sm:$0xff]
    %v1321 = vld [vmem:[%s5 + $0x28c] sm:$0xff]
    %v1322 = vld [vmem:[%s5 + $0x294] sm:$0xff]
    %v1323 = vld [vmem:[%s5 + $0x29c] sm:$0xf]
    %v1324 = vld [vmem:[%s5 + $0x2a0] sm:$0xff]
    %v1325 = vld [vmem:[%s5 + $0x2a8] sm:$0xff]
    %v1326 = vld [vmem:[%s5 + $0x2b0] sm:$0xff]
    %v1327 = vld [vmem:[%s5 + $0x2b8] sm:$0xf]
    %v1328 = vld [vmem:[%s5 + $0x2bc] sm:$0xff]
    %v1329 = vld [vmem:[%s5 + $0x2c4] sm:$0xff]
    %v1330 = vld [vmem:[%s5 + $0x2cc] sm:$0xff]
    %v1331 = vld [vmem:[%s5 + $0x2d4] sm:$0xf]
    %v1332 = vld [vmem:[%s5 + $0x2d8] sm:$0xff]
    %v1333 = vld [vmem:[%s5 + $0x2e0] sm:$0xff]
    %v1334 = vld [vmem:[%s5 + $0x2e8] sm:$0xff]
    %v1335 = vld [vmem:[%s5 + $0x2f0] sm:$0xf]
    %v1336 = vld [vmem:[%s5 + $0x2f4] sm:$0xff]
    %v1337 = vld [vmem:[%s5 + $0x2fc] sm:$0xff]
    %v1338 = vld [vmem:[%s5 + $0x304] sm:$0xff]
    %v1339 = vld [vmem:[%s5 + $0x30c] sm:$0xf]
    %v1340 = vld [vmem:[%s5 + $0x310] sm:$0xff]
    %v1341 = vld [vmem:[%s5 + $0x318] sm:$0xff]
    %v1342 = vld [vmem:[%s5 + $0x320] sm:$0xff]
    %v1343 = vld [vmem:[%s5 + $0x328] sm:$0xf]
    %v1344 = vld [vmem:[%s5 + $0x32c] sm:$0xff]
    %v1345 = vld [vmem:[%s5 + $0x334] sm:$0xff]
    %v1346 = vld [vmem:[%s5 + $0x33c] sm:$0xff]
    %v1347 = vld [vmem:[%s5 + $0x344] sm:$0xf]
    %v1348 = vld [vmem:[%s5 + $0x348] sm:$0xff]
    %v1349 = vld [vmem:[%s5 + $0x350] sm:$0xff]
    %v1350 = vld [vmem:[%s5 + $0x358] sm:$0xff]
    %v1351 = vld [vmem:[%s5 + $0x360] sm:$0xf]
    %v1352 = vld [vmem:[%s5 + $0x364] sm:$0xff]
    %v1353 = vld [vmem:[%s5 + $0x36c] sm:$0xff]
    %v1354 = vld [vmem:[%s5 + $0x374] sm:$0xff]
    %v1355 = vld [vmem:[%s5 + $0x37c] sm:$0xf]
    %v1356 = vld [vmem:[%s5 + $0x380] sm:$0xff]
    %v1357 = vld [vmem:[%s5 + $0x388] sm:$0xff]
    %v1358 = vld [vmem:[%s5 + $0x390] sm:$0xff]
    %v1359 = vld [vmem:[%s5 + $0x398] sm:$0xf]
    %v1360 = vld [vmem:[%s5 + $0x39c] sm:$0xff]
    %v1361 = vld [vmem:[%s5 + $0x3a4] sm:$0xff]
    %v1362 = vld [vmem:[%s5 + $0x3ac] sm:$0xff]
    %v1363 = vld [vmem:[%s5 + $0x3b4] sm:$0xf]
    %v1364 = vld [vmem:[%s5 + $0x3b8] sm:$0xff]
    %v1365 = vld [vmem:[%s5 + $0x3c0] sm:$0xff]
    %v1366 = vld [vmem:[%s5 + $0x3c8] sm:$0xff]
    %v1367 = vld [vmem:[%s5 + $0x3d0] sm:$0xf]
    %v1368 = vld [vmem:[%s5 + $0x3d4] sm:$0xff]
    %v1369 = vld [vmem:[%s5 + $0x3dc] sm:$0xff]
    %v1370 = vld [vmem:[%s5 + $0x3e4] sm:$0xff]
    %v1371 = vld [vmem:[%s5 + $0x3ec] sm:$0xf]
    %v1372 = vld [vmem:[%s5 + $0x3f0] sm:$0xff]
    %v1373 = vld [vmem:[%s5 + $0x3f8] sm:$0xff]
    %v1374 = vld [vmem:[%s5 + $0x400] sm:$0xff]
    %v1375 = vld [vmem:[%s5 + $0x408] sm:$0xf]
    %v1376 = vld [vmem:[%s5 + $0x40c] sm:$0xff]
    %v1377 = vld [vmem:[%s5 + $0x414] sm:$0xff]
    %v1378 = vld [vmem:[%s5 + $0x41c] sm:$0xff]
    %v1379 = vld [vmem:[%s5 + $0x424] sm:$0xf]
    %v1380 = vld [vmem:[%s5 + $0x428] sm:$0xff]
    %v1381 = vld [vmem:[%s5 + $0x430] sm:$0xff]
    %v1382 = vld [vmem:[%s5 + $0x438] sm:$0xff]
    %v1383 = vld [vmem:[%s5 + $0x440] sm:$0xf]
    %v1384 = vld [vmem:[%s5 + $0x444] sm:$0xff]
    %v1385 = vld [vmem:[%s5 + $0x44c] sm:$0xff]
    %v1386 = vld [vmem:[%s5 + $0x454] sm:$0xff]
    %v1387 = vld [vmem:[%s5 + $0x45c] sm:$0xf]
    %v1388 = vld [vmem:[%s5 + $0x460] sm:$0xff]
    %v1389 = vld [vmem:[%s5 + $0x468] sm:$0xff]
    %v1390 = vld [vmem:[%s5 + $0x470] sm:$0xff]
    %v1391 = vld [vmem:[%s5 + $0x478] sm:$0xf]
    %v1392 = vld [vmem:[%s5 + $0x47c] sm:$0xff]
    %v1393 = vld [vmem:[%s5 + $0x484] sm:$0xff]
    %v1394 = vld [vmem:[%s5 + $0x48c] sm:$0xff]
    %v1395 = vld [vmem:[%s5 + $0x494] sm:$0xf]
    %v1396 = vld [vmem:[%s5 + $0x498] sm:$0xff]
    %v1397 = vld [vmem:[%s5 + $0x4a0] sm:$0xff]
    %v1398 = vld [vmem:[%s5 + $0x4a8] sm:$0xff]
    %v1399 = vld [vmem:[%s5 + $0x4b0] sm:$0xf]
    %v1400 = vld [vmem:[%s5 + $0x4b4] sm:$0xff]
    %v1401 = vld [vmem:[%s5 + $0x4bc] sm:$0xff]
    %v1402 = vld [vmem:[%s5 + $0x4c4] sm:$0xff]
    %v1403 = vld [vmem:[%s5 + $0x4cc] sm:$0xf]
    %v1404 = vld [vmem:[%s5 + $0x4d0] sm:$0xff]
    %v1405 = vld [vmem:[%s5 + $0x4d8] sm:$0xff]
    %v1406 = vld [vmem:[%s5 + $0x4e0] sm:$0xff]
    %v1407 = vld [vmem:[%s5 + $0x4e8] sm:$0xf]
    %v1408 = vld [vmem:[%s5 + $0x4ec] sm:$0xff]
    %v1409 = vld [vmem:[%s5 + $0x4f4] sm:$0xff]
    %v1410 = vld [vmem:[%s5 + $0x4fc] sm:$0xff]
    %v1411 = vld [vmem:[%s5 + $0x504] sm:$0xf]
    %v1412 = vld [vmem:[%s5 + $0x508] sm:$0xff]
    %v1413 = vld [vmem:[%s5 + $0x510] sm:$0xff]
    %v1414 = vld [vmem:[%s5 + $0x518] sm:$0xff]
    %v1415 = vld [vmem:[%s5 + $0x520] sm:$0xf]
    %v1416 = vld [vmem:[%s5 + $0x524] sm:$0xff]
    %v1417 = vld [vmem:[%s5 + $0x52c] sm:$0xff]
    %v1418 = vld [vmem:[%s5 + $0x534] sm:$0xff]
    %v1419 = vld [vmem:[%s5 + $0x53c] sm:$0xf]
    %v1420 = vld [vmem:[%s5 + $0x540] sm:$0xff]
    %v1421 = vld [vmem:[%s5 + $0x548] sm:$0xff]
    %v1422 = vld [vmem:[%s5 + $0x550] sm:$0xff]
    %v1423 = vld [vmem:[%s5 + $0x558] sm:$0xf]
    %v1424 = vld [vmem:[%s5 + $0x55c] sm:$0xff]
    %v1425 = vld [vmem:[%s5 + $0x564] sm:$0xff]
    %v1426 = vld [vmem:[%s5 + $0x56c] sm:$0xff]
    %v1427 = vld [vmem:[%s5 + $0x574] sm:$0xf]
    %v1428 = vld [vmem:[%s5 + $0x578] sm:$0xff]
    %v1429 = vld [vmem:[%s5 + $0x580] sm:$0xff]
    %v1430 = vld [vmem:[%s5 + $0x588] sm:$0xff]
    %v1431 = vld [vmem:[%s5 + $0x590] sm:$0xf]
    %v1432 = vld [vmem:[%s5 + $0x594] sm:$0xff]
    %v1433 = vld [vmem:[%s5 + $0x59c] sm:$0xff]
    %v1434 = vld [vmem:[%s5 + $0x5a4] sm:$0xff]
    %v1435 = vld [vmem:[%s5 + $0x5ac] sm:$0xf]
    %v1436 = vld [vmem:[%s5 + $0x5b0] sm:$0xff]
    %v1437 = vld [vmem:[%s5 + $0x5b8] sm:$0xff]
    %v1438 = vld [vmem:[%s5 + $0x5c0] sm:$0xff]
    %v1439 = vld [vmem:[%s5 + $0x5c8] sm:$0xf]
    %v1440 = vld [vmem:[%s5 + $0x5cc] sm:$0xff]
    %v1441 = vld [vmem:[%s5 + $0x5d4] sm:$0xff]
    %v1442 = vld [vmem:[%s5 + $0x5dc] sm:$0xff]
    %v1443 = vld [vmem:[%s5 + $0x5e4] sm:$0xf]
    %v1444 = vld [vmem:[%s5 + $0x5e8] sm:$0xff]
    %v1445 = vld [vmem:[%s5 + $0x5f0] sm:$0xff]
    %v1446 = vld [vmem:[%s5 + $0x5f8] sm:$0xff]
    %v1447 = vld [vmem:[%s5 + $0x600] sm:$0xf]
    %v1448 = vld [vmem:[%s5 + $0x604] sm:$0xff]
    %v1449 = vld [vmem:[%s5 + $0x60c] sm:$0xff]
    %v1450 = vld [vmem:[%s5 + $0x614] sm:$0xff]
    %v1451 = vld [vmem:[%s5 + $0x61c] sm:$0xf]
    %v1452 = vld [vmem:[%s5 + $0x620] sm:$0xff]
    %v1453 = vld [vmem:[%s5 + $0x628] sm:$0xff]
    %v1454 = vld [vmem:[%s5 + $0x630] sm:$0xff]
    %v1455 = vld [vmem:[%s5 + $0x638] sm:$0xf]
    %v1456 = vld [vmem:[%s5 + $0x63c] sm:$0xff]
    %v1457 = vld [vmem:[%s5 + $0x644] sm:$0xff]
    %v1458 = vld [vmem:[%s5 + $0x64c] sm:$0xff]
    %v1459 = vld [vmem:[%s5 + $0x654] sm:$0xf]
    %v1460 = vld [vmem:[%s5 + $0x658] sm:$0xff]
    %v1461 = vld [vmem:[%s5 + $0x660] sm:$0xff]
    %v1462 = vld [vmem:[%s5 + $0x668] sm:$0xff]
    %v1463 = vld [vmem:[%s5 + $0x670] sm:$0xf]
    %v1464 = vld [vmem:[%s5 + $0x674] sm:$0xff]
    %v1465 = vld [vmem:[%s5 + $0x67c] sm:$0xff]
    %v1466 = vld [vmem:[%s5 + $0x684] sm:$0xff]
    %v1467 = vld [vmem:[%s5 + $0x68c] sm:$0xf]
    %v1468 = vld [vmem:[%s5 + $0x690] sm:$0xff]
    %v1469 = vld [vmem:[%s5 + $0x698] sm:$0xff]
    %v1470 = vld [vmem:[%s5 + $0x6a0] sm:$0xff]
    %v1471 = vld [vmem:[%s5 + $0x6a8] sm:$0xf]
    %v1472 = vld [vmem:[%s5 + $0x6ac] sm:$0xff]
    %v1473 = vld [vmem:[%s5 + $0x6b4] sm:$0xff]
    %v1474 = vld [vmem:[%s5 + $0x6bc] sm:$0xff]
    %v1475 = vld [vmem:[%s5 + $0x6c4] sm:$0xf]
    %v1476 = vld [vmem:[%s5 + $0x6c8] sm:$0xff]
    %v1477 = vld [vmem:[%s5 + $0x6d0] sm:$0xff]
    %v1478 = vld [vmem:[%s5 + $0x6d8] sm:$0xff]
    %v1479 = vld [vmem:[%s5 + $0x6e0] sm:$0xf]
    %v1480 = vld [vmem:[%s5 + $0x6e4] sm:$0xff]
    %v1481 = vld [vmem:[%s5 + $0x6ec] sm:$0xff]
    %v1482 = vld [vmem:[%s5 + $0x6f4] sm:$0xff]
    %v1483 = vld [vmem:[%s5 + $0x6fc] sm:$0xf]
    %v1740 = vunpack.c.l.b16 %v1228
    %v1741 = vunpack.c.h.b16 %v1228
    %v1742 = vunpack.c.l.b16 %v1229
    %v1743 = vunpack.c.h.b16 %v1229
    %v1744 = vunpack.c.l.b16 %v1230
    %v1745 = vunpack.c.h.b16 %v1230
    %v1746 = vunpack.c.l.b16 %v1231
    %v1747 = vunpack.c.l.b16 %v1232
    %v1748 = vunpack.c.h.b16 %v1232
    %v1749 = vunpack.c.l.b16 %v1233
    %v1750 = vunpack.c.h.b16 %v1233
    %v1751 = vunpack.c.l.b16 %v1234
    %v1752 = vunpack.c.h.b16 %v1234
    %v1753 = vunpack.c.l.b16 %v1235
    %v1754 = vunpack.c.l.b16 %v1236
    %v1755 = vunpack.c.h.b16 %v1236
    %v1756 = vunpack.c.l.b16 %v1237
    %v1757 = vunpack.c.h.b16 %v1237
    %v1758 = vunpack.c.l.b16 %v1238
    %v1759 = vunpack.c.h.b16 %v1238
    %v1760 = vunpack.c.l.b16 %v1239
    %v1761 = vunpack.c.l.b16 %v1240
    %v1762 = vunpack.c.h.b16 %v1240
    %v1763 = vunpack.c.l.b16 %v1241
    %v1764 = vunpack.c.h.b16 %v1241
    %v1765 = vunpack.c.l.b16 %v1242
    %v1766 = vunpack.c.h.b16 %v1242
    %v1767 = vunpack.c.l.b16 %v1243
    %v1768 = vunpack.c.l.b16 %v1244
    %v1769 = vunpack.c.h.b16 %v1244
    %v1770 = vunpack.c.l.b16 %v1245
    %v1771 = vunpack.c.h.b16 %v1245
    %v1772 = vunpack.c.l.b16 %v1246
    %v1773 = vunpack.c.h.b16 %v1246
    %v1774 = vunpack.c.l.b16 %v1247
    %v1775 = vunpack.c.l.b16 %v1248
    %v1776 = vunpack.c.h.b16 %v1248
    %v1777 = vunpack.c.l.b16 %v1249
    %v1778 = vunpack.c.h.b16 %v1249
    %v1779 = vunpack.c.l.b16 %v1250
    %v1780 = vunpack.c.h.b16 %v1250
    %v1781 = vunpack.c.l.b16 %v1251
    %v1782 = vunpack.c.l.b16 %v1252
    %v1783 = vunpack.c.h.b16 %v1252
    %v1784 = vunpack.c.l.b16 %v1253
    %v1785 = vunpack.c.h.b16 %v1253
    %v1786 = vunpack.c.l.b16 %v1254
    %v1787 = vunpack.c.h.b16 %v1254
    %v1788 = vunpack.c.l.b16 %v1255
    %v1789 = vunpack.c.l.b16 %v1256
    %v1790 = vunpack.c.h.b16 %v1256
    %v1791 = vunpack.c.l.b16 %v1257
    %v1792 = vunpack.c.h.b16 %v1257
    %v1793 = vunpack.c.l.b16 %v1258
    %v1794 = vunpack.c.h.b16 %v1258
    %v1795 = vunpack.c.l.b16 %v1259
    %v1796 = vunpack.c.l.b16 %v1260
    %v1797 = vunpack.c.h.b16 %v1260
    %v1798 = vunpack.c.l.b16 %v1261
    %v1799 = vunpack.c.h.b16 %v1261
    %v1800 = vunpack.c.l.b16 %v1262
    %v1801 = vunpack.c.h.b16 %v1262
    %v1802 = vunpack.c.l.b16 %v1263
    %v1803 = vunpack.c.l.b16 %v1264
    %v1804 = vunpack.c.h.b16 %v1264
    %v1805 = vunpack.c.l.b16 %v1265
    %v1806 = vunpack.c.h.b16 %v1265
    %v1807 = vunpack.c.l.b16 %v1266
    %v1808 = vunpack.c.h.b16 %v1266
    %v1809 = vunpack.c.l.b16 %v1267
    %v1810 = vunpack.c.l.b16 %v1268
    %v1811 = vunpack.c.h.b16 %v1268
    %v1812 = vunpack.c.l.b16 %v1269
    %v1813 = vunpack.c.h.b16 %v1269
    %v1814 = vunpack.c.l.b16 %v1270
    %v1815 = vunpack.c.h.b16 %v1270
    %v1816 = vunpack.c.l.b16 %v1271
    %v1817 = vunpack.c.l.b16 %v1272
    %v1818 = vunpack.c.h.b16 %v1272
    %v1819 = vunpack.c.l.b16 %v1273
    %v1820 = vunpack.c.h.b16 %v1273
    %v1821 = vunpack.c.l.b16 %v1274
    %v1822 = vunpack.c.h.b16 %v1274
    %v1823 = vunpack.c.l.b16 %v1275
    %v1824 = vunpack.c.l.b16 %v1276
    %v1825 = vunpack.c.h.b16 %v1276
    %v1826 = vunpack.c.l.b16 %v1277
    %v1827 = vunpack.c.h.b16 %v1277
    %v1828 = vunpack.c.l.b16 %v1278
    %v1829 = vunpack.c.h.b16 %v1278
    %v1830 = vunpack.c.l.b16 %v1279
    %v1831 = vunpack.c.l.b16 %v1280
    %v1832 = vunpack.c.h.b16 %v1280
    %v1833 = vunpack.c.l.b16 %v1281
    %v1834 = vunpack.c.h.b16 %v1281
    %v1835 = vunpack.c.l.b16 %v1282
    %v1836 = vunpack.c.h.b16 %v1282
    %v1837 = vunpack.c.l.b16 %v1283
    %v1838 = vunpack.c.l.b16 %v1284
    %v1839 = vunpack.c.h.b16 %v1284
    %v1840 = vunpack.c.l.b16 %v1285
    %v1841 = vunpack.c.h.b16 %v1285
    %v1842 = vunpack.c.l.b16 %v1286
    %v1843 = vunpack.c.h.b16 %v1286
    %v1844 = vunpack.c.l.b16 %v1287
    %v1845 = vunpack.c.l.b16 %v1288
    %v1846 = vunpack.c.h.b16 %v1288
    %v1847 = vunpack.c.l.b16 %v1289
    %v1848 = vunpack.c.h.b16 %v1289
    %v1849 = vunpack.c.l.b16 %v1290
    %v1850 = vunpack.c.h.b16 %v1290
    %v1851 = vunpack.c.l.b16 %v1291
    %v1852 = vunpack.c.l.b16 %v1292
    %v1853 = vunpack.c.h.b16 %v1292
    %v1854 = vunpack.c.l.b16 %v1293
    %v1855 = vunpack.c.h.b16 %v1293
    %v1856 = vunpack.c.l.b16 %v1294
    %v1857 = vunpack.c.h.b16 %v1294
    %v1858 = vunpack.c.l.b16 %v1295
    %v1859 = vunpack.c.l.b16 %v1296
    %v1860 = vunpack.c.h.b16 %v1296
    %v1861 = vunpack.c.l.b16 %v1297
    %v1862 = vunpack.c.h.b16 %v1297
    %v1863 = vunpack.c.l.b16 %v1298
    %v1864 = vunpack.c.h.b16 %v1298
    %v1865 = vunpack.c.l.b16 %v1299
    %v1866 = vunpack.c.l.b16 %v1300
    %v1867 = vunpack.c.h.b16 %v1300
    %v1868 = vunpack.c.l.b16 %v1301
    %v1869 = vunpack.c.h.b16 %v1301
    %v1870 = vunpack.c.l.b16 %v1302
    %v1871 = vunpack.c.h.b16 %v1302
    %v1872 = vunpack.c.l.b16 %v1303
    %v1873 = vunpack.c.l.b16 %v1304
    %v1874 = vunpack.c.h.b16 %v1304
    %v1875 = vunpack.c.l.b16 %v1305
    %v1876 = vunpack.c.h.b16 %v1305
    %v1877 = vunpack.c.l.b16 %v1306
    %v1878 = vunpack.c.h.b16 %v1306
    %v1879 = vunpack.c.l.b16 %v1307
    %v1880 = vunpack.c.l.b16 %v1308
    %v1881 = vunpack.c.h.b16 %v1308
    %v1882 = vunpack.c.l.b16 %v1309
    %v1883 = vunpack.c.h.b16 %v1309
    %v1884 = vunpack.c.l.b16 %v1310
    %v1885 = vunpack.c.h.b16 %v1310
    %v1886 = vunpack.c.l.b16 %v1311
    %v1887 = vunpack.c.l.b16 %v1312
    %v1888 = vunpack.c.h.b16 %v1312
    %v1889 = vunpack.c.l.b16 %v1313
    %v1890 = vunpack.c.h.b16 %v1313
    %v1891 = vunpack.c.l.b16 %v1314
    %v1892 = vunpack.c.h.b16 %v1314
    %v1893 = vunpack.c.l.b16 %v1315
    %v1894 = vunpack.c.l.b16 %v1316
    %v1895 = vunpack.c.h.b16 %v1316
    %v1896 = vunpack.c.l.b16 %v1317
    %v1897 = vunpack.c.h.b16 %v1317
    %v1898 = vunpack.c.l.b16 %v1318
    %v1899 = vunpack.c.h.b16 %v1318
    %v1900 = vunpack.c.l.b16 %v1319
    %v1901 = vunpack.c.l.b16 %v1320
    %v1902 = vunpack.c.h.b16 %v1320
    %v1903 = vunpack.c.l.b16 %v1321
    %v1904 = vunpack.c.h.b16 %v1321
    %v1905 = vunpack.c.l.b16 %v1322
    %v1906 = vunpack.c.h.b16 %v1322
    %v1907 = vunpack.c.l.b16 %v1323
    %v1908 = vunpack.c.l.b16 %v1324
    %v1909 = vunpack.c.h.b16 %v1324
    %v1910 = vunpack.c.l.b16 %v1325
    %v1911 = vunpack.c.h.b16 %v1325
    %v1912 = vunpack.c.l.b16 %v1326
    %v1913 = vunpack.c.h.b16 %v1326
    %v1914 = vunpack.c.l.b16 %v1327
    %v1915 = vunpack.c.l.b16 %v1328
    %v1916 = vunpack.c.h.b16 %v1328
    %v1917 = vunpack.c.l.b16 %v1329
    %v1918 = vunpack.c.h.b16 %v1329
    %v1919 = vunpack.c.l.b16 %v1330
    %v1920 = vunpack.c.h.b16 %v1330
    %v1921 = vunpack.c.l.b16 %v1331
    %v1922 = vunpack.c.l.b16 %v1332
    %v1923 = vunpack.c.h.b16 %v1332
    %v1924 = vunpack.c.l.b16 %v1333
    %v1925 = vunpack.c.h.b16 %v1333
    %v1926 = vunpack.c.l.b16 %v1334
    %v1927 = vunpack.c.h.b16 %v1334
    %v1928 = vunpack.c.l.b16 %v1335
    %v1929 = vunpack.c.l.b16 %v1336
    %v1930 = vunpack.c.h.b16 %v1336
    %v1931 = vunpack.c.l.b16 %v1337
    %v1932 = vunpack.c.h.b16 %v1337
    %v1933 = vunpack.c.l.b16 %v1338
    %v1934 = vunpack.c.h.b16 %v1338
    %v1935 = vunpack.c.l.b16 %v1339
    %v1936 = vunpack.c.l.b16 %v1340
    %v1937 = vunpack.c.h.b16 %v1340
    %v1938 = vunpack.c.l.b16 %v1341
    %v1939 = vunpack.c.h.b16 %v1341
    %v1940 = vunpack.c.l.b16 %v1342
    %v1941 = vunpack.c.h.b16 %v1342
    %v1942 = vunpack.c.l.b16 %v1343
    %v1943 = vunpack.c.l.b16 %v1344
    %v1944 = vunpack.c.h.b16 %v1344
    %v1945 = vunpack.c.l.b16 %v1345
    %v1946 = vunpack.c.h.b16 %v1345
    %v1947 = vunpack.c.l.b16 %v1346
    %v1948 = vunpack.c.h.b16 %v1346
    %v1949 = vunpack.c.l.b16 %v1347
    %v1950 = vunpack.c.l.b16 %v1348
    %v1951 = vunpack.c.h.b16 %v1348
    %v1952 = vunpack.c.l.b16 %v1349
    %v1953 = vunpack.c.h.b16 %v1349
    %v1954 = vunpack.c.l.b16 %v1350
    %v1955 = vunpack.c.h.b16 %v1350
    %v1956 = vunpack.c.l.b16 %v1351
    %v1957 = vunpack.c.l.b16 %v1352
    %v1958 = vunpack.c.h.b16 %v1352
    %v1959 = vunpack.c.l.b16 %v1353
    %v1960 = vunpack.c.h.b16 %v1353
    %v1961 = vunpack.c.l.b16 %v1354
    %v1962 = vunpack.c.h.b16 %v1354
    %v1963 = vunpack.c.l.b16 %v1355
    %v1964 = vunpack.c.l.b16 %v1356
    %v1965 = vunpack.c.h.b16 %v1356
    %v1966 = vunpack.c.l.b16 %v1357
    %v1967 = vunpack.c.h.b16 %v1357
    %v1968 = vunpack.c.l.b16 %v1358
    %v1969 = vunpack.c.h.b16 %v1358
    %v1970 = vunpack.c.l.b16 %v1359
    %v1971 = vunpack.c.l.b16 %v1360
    %v1972 = vunpack.c.h.b16 %v1360
    %v1973 = vunpack.c.l.b16 %v1361
    %v1974 = vunpack.c.h.b16 %v1361
    %v1975 = vunpack.c.l.b16 %v1362
    %v1976 = vunpack.c.h.b16 %v1362
    %v1977 = vunpack.c.l.b16 %v1363
    %v1978 = vunpack.c.l.b16 %v1364
    %v1979 = vunpack.c.h.b16 %v1364
    %v1980 = vunpack.c.l.b16 %v1365
    %v1981 = vunpack.c.h.b16 %v1365
    %v1982 = vunpack.c.l.b16 %v1366
    %v1983 = vunpack.c.h.b16 %v1366
    %v1984 = vunpack.c.l.b16 %v1367
    %v1985 = vunpack.c.l.b16 %v1368
    %v1986 = vunpack.c.h.b16 %v1368
    %v1987 = vunpack.c.l.b16 %v1369
    %v1988 = vunpack.c.h.b16 %v1369
    %v1989 = vunpack.c.l.b16 %v1370
    %v1990 = vunpack.c.h.b16 %v1370
    %v1991 = vunpack.c.l.b16 %v1371
    %v1992 = vunpack.c.l.b16 %v1372
    %v1993 = vunpack.c.h.b16 %v1372
    %v1994 = vunpack.c.l.b16 %v1373
    %v1995 = vunpack.c.h.b16 %v1373
    %v1996 = vunpack.c.l.b16 %v1374
    %v1997 = vunpack.c.h.b16 %v1374
    %v1998 = vunpack.c.l.b16 %v1375
    %v1999 = vunpack.c.l.b16 %v1376
    %v2000 = vunpack.c.h.b16 %v1376
    %v2001 = vunpack.c.l.b16 %v1377
    %v2002 = vunpack.c.h.b16 %v1377
    %v2003 = vunpack.c.l.b16 %v1378
    %v2004 = vunpack.c.h.b16 %v1378
    %v2005 = vunpack.c.l.b16 %v1379
    %v2006 = vunpack.c.l.b16 %v1380
    %v2007 = vunpack.c.h.b16 %v1380
    %v2008 = vunpack.c.l.b16 %v1381
    %v2009 = vunpack.c.h.b16 %v1381
    %v2010 = vunpack.c.l.b16 %v1382
    %v2011 = vunpack.c.h.b16 %v1382
    %v2012 = vunpack.c.l.b16 %v1383
    %v2013 = vunpack.c.l.b16 %v1384
    %v2014 = vunpack.c.h.b16 %v1384
    %v2015 = vunpack.c.l.b16 %v1385
    %v2016 = vunpack.c.h.b16 %v1385
    %v2017 = vunpack.c.l.b16 %v1386
    %v2018 = vunpack.c.h.b16 %v1386
    %v2019 = vunpack.c.l.b16 %v1387
    %v2020 = vunpack.c.l.b16 %v1388
    %v2021 = vunpack.c.h.b16 %v1388
    %v2022 = vunpack.c.l.b16 %v1389
    %v2023 = vunpack.c.h.b16 %v1389
    %v2024 = vunpack.c.l.b16 %v1390
    %v2025 = vunpack.c.h.b16 %v1390
    %v2026 = vunpack.c.l.b16 %v1391
    %v2027 = vunpack.c.l.b16 %v1392
    %v2028 = vunpack.c.h.b16 %v1392
    %v2029 = vunpack.c.l.b16 %v1393
    %v2030 = vunpack.c.h.b16 %v1393
    %v2031 = vunpack.c.l.b16 %v1394
    %v2032 = vunpack.c.h.b16 %v1394
    %v2033 = vunpack.c.l.b16 %v1395
    %v2034 = vunpack.c.l.b16 %v1396
    %v2035 = vunpack.c.h.b16 %v1396
    %v2036 = vunpack.c.l.b16 %v1397
    %v2037 = vunpack.c.h.b16 %v1397
    %v2038 = vunpack.c.l.b16 %v1398
    %v2039 = vunpack.c.h.b16 %v1398
    %v2040 = vunpack.c.l.b16 %v1399
    %v2041 = vunpack.c.l.b16 %v1400
    %v2042 = vunpack.c.h.b16 %v1400
    %v2043 = vunpack.c.l.b16 %v1401
    %v2044 = vunpack.c.h.b16 %v1401
    %v2045 = vunpack.c.l.b16 %v1402
    %v2046 = vunpack.c.h.b16 %v1402
    %v2047 = vunpack.c.l.b16 %v1403
    %v2048 = vunpack.c.l.b16 %v1404
    %v2049 = vunpack.c.h.b16 %v1404
    %v2050 = vunpack.c.l.b16 %v1405
    %v2051 = vunpack.c.h.b16 %v1405
    %v2052 = vunpack.c.l.b16 %v1406
    %v2053 = vunpack.c.h.b16 %v1406
    %v2054 = vunpack.c.l.b16 %v1407
    %v2055 = vunpack.c.l.b16 %v1408
    %v2056 = vunpack.c.h.b16 %v1408
    %v2057 = vunpack.c.l.b16 %v1409
    %v2058 = vunpack.c.h.b16 %v1409
    %v2059 = vunpack.c.l.b16 %v1410
    %v2060 = vunpack.c.h.b16 %v1410
    %v2061 = vunpack.c.l.b16 %v1411
    %v2062 = vunpack.c.l.b16 %v1412
    %v2063 = vunpack.c.h.b16 %v1412
    %v2064 = vunpack.c.l.b16 %v1413
    %v2065 = vunpack.c.h.b16 %v1413
    %v2066 = vunpack.c.l.b16 %v1414
    %v2067 = vunpack.c.h.b16 %v1414
    %v2068 = vunpack.c.l.b16 %v1415
    %v2069 = vunpack.c.l.b16 %v1416
    %v2070 = vunpack.c.h.b16 %v1416
    %v2071 = vunpack.c.l.b16 %v1417
    %v2072 = vunpack.c.h.b16 %v1417
    %v2073 = vunpack.c.l.b16 %v1418
    %v2074 = vunpack.c.h.b16 %v1418
    %v2075 = vunpack.c.l.b16 %v1419
    %v2076 = vunpack.c.l.b16 %v1420
    %v2077 = vunpack.c.h.b16 %v1420
    %v2078 = vunpack.c.l.b16 %v1421
    %v2079 = vunpack.c.h.b16 %v1421
    %v2080 = vunpack.c.l.b16 %v1422
    %v2081 = vunpack.c.h.b16 %v1422
    %v2082 = vunpack.c.l.b16 %v1423
    %v2083 = vunpack.c.l.b16 %v1424
    %v2084 = vunpack.c.h.b16 %v1424
    %v2085 = vunpack.c.l.b16 %v1425
    %v2086 = vunpack.c.h.b16 %v1425
    %v2087 = vunpack.c.l.b16 %v1426
    %v2088 = vunpack.c.h.b16 %v1426
    %v2089 = vunpack.c.l.b16 %v1427
    %v2090 = vunpack.c.l.b16 %v1428
    %v2091 = vunpack.c.h.b16 %v1428
    %v2092 = vunpack.c.l.b16 %v1429
    %v2093 = vunpack.c.h.b16 %v1429
    %v2094 = vunpack.c.l.b16 %v1430
    %v2095 = vunpack.c.h.b16 %v1430
    %v2096 = vunpack.c.l.b16 %v1431
    %v2097 = vunpack.c.l.b16 %v1432
    %v2098 = vunpack.c.h.b16 %v1432
    %v2099 = vunpack.c.l.b16 %v1433
    %v2100 = vunpack.c.h.b16 %v1433
    %v2101 = vunpack.c.l.b16 %v1434
    %v2102 = vunpack.c.h.b16 %v1434
    %v2103 = vunpack.c.l.b16 %v1435
    %v2104 = vunpack.c.l.b16 %v1436
    %v2105 = vunpack.c.h.b16 %v1436
    %v2106 = vunpack.c.l.b16 %v1437
    %v2107 = vunpack.c.h.b16 %v1437
    %v2108 = vunpack.c.l.b16 %v1438
    %v2109 = vunpack.c.h.b16 %v1438
    %v2110 = vunpack.c.l.b16 %v1439
    %v2111 = vunpack.c.l.b16 %v1440
    %v2112 = vunpack.c.h.b16 %v1440
    %v2113 = vunpack.c.l.b16 %v1441
    %v2114 = vunpack.c.h.b16 %v1441
    %v2115 = vunpack.c.l.b16 %v1442
    %v2116 = vunpack.c.h.b16 %v1442
    %v2117 = vunpack.c.l.b16 %v1443
    %v2118 = vunpack.c.l.b16 %v1444
    %v2119 = vunpack.c.h.b16 %v1444
    %v2120 = vunpack.c.l.b16 %v1445
    %v2121 = vunpack.c.h.b16 %v1445
    %v2122 = vunpack.c.l.b16 %v1446
    %v2123 = vunpack.c.h.b16 %v1446
    %v2124 = vunpack.c.l.b16 %v1447
    %v2125 = vunpack.c.l.b16 %v1448
    %v2126 = vunpack.c.h.b16 %v1448
    %v2127 = vunpack.c.l.b16 %v1449
    %v2128 = vunpack.c.h.b16 %v1449
    %v2129 = vunpack.c.l.b16 %v1450
    %v2130 = vunpack.c.h.b16 %v1450
    %v2131 = vunpack.c.l.b16 %v1451
    %v2132 = vunpack.c.l.b16 %v1452
    %v2133 = vunpack.c.h.b16 %v1452
    %v2134 = vunpack.c.l.b16 %v1453
    %v2135 = vunpack.c.h.b16 %v1453
    %v2136 = vunpack.c.l.b16 %v1454
    %v2137 = vunpack.c.h.b16 %v1454
    %v2138 = vunpack.c.l.b16 %v1455
    %v2139 = vunpack.c.l.b16 %v1456
    %v2140 = vunpack.c.h.b16 %v1456
    %v2141 = vunpack.c.l.b16 %v1457
    %v2142 = vunpack.c.h.b16 %v1457
    %v2143 = vunpack.c.l.b16 %v1458
    %v2144 = vunpack.c.h.b16 %v1458
    %v2145 = vunpack.c.l.b16 %v1459
    %v2146 = vunpack.c.l.b16 %v1460
    %v2147 = vunpack.c.h.b16 %v1460
    %v2148 = vunpack.c.l.b16 %v1461
    %v2149 = vunpack.c.h.b16 %v1461
    %v2150 = vunpack.c.l.b16 %v1462
    %v2151 = vunpack.c.h.b16 %v1462
    %v2152 = vunpack.c.l.b16 %v1463
    %v2153 = vunpack.c.l.b16 %v1464
    %v2154 = vunpack.c.h.b16 %v1464
    %v2155 = vunpack.c.l.b16 %v1465
    %v2156 = vunpack.c.h.b16 %v1465
    %v2157 = vunpack.c.l.b16 %v1466
    %v2158 = vunpack.c.h.b16 %v1466
    %v2159 = vunpack.c.l.b16 %v1467
    %v2160 = vunpack.c.l.b16 %v1468
    %v2161 = vunpack.c.h.b16 %v1468
    %v2162 = vunpack.c.l.b16 %v1469
    %v2163 = vunpack.c.h.b16 %v1469
    %v2164 = vunpack.c.l.b16 %v1470
    %v2165 = vunpack.c.h.b16 %v1470
    %v2166 = vunpack.c.l.b16 %v1471
    %v2167 = vunpack.c.l.b16 %v1472
    %v2168 = vunpack.c.h.b16 %v1472
    %v2169 = vunpack.c.l.b16 %v1473
    %v2170 = vunpack.c.h.b16 %v1473
    %v2171 = vunpack.c.l.b16 %v1474
    %v2172 = vunpack.c.h.b16 %v1474
    %v2173 = vunpack.c.l.b16 %v1475
    %v2174 = vunpack.c.l.b16 %v1476
    %v2175 = vunpack.c.h.b16 %v1476
    %v2176 = vunpack.c.l.b16 %v1477
    %v2177 = vunpack.c.h.b16 %v1477
    %v2178 = vunpack.c.l.b16 %v1478
    %v2179 = vunpack.c.h.b16 %v1478
    %v2180 = vunpack.c.l.b16 %v1479
    %v2181 = vunpack.c.l.b16 %v1480
    %v2182 = vunpack.c.h.b16 %v1480
    %v2183 = vunpack.c.l.b16 %v1481
    %v2184 = vunpack.c.h.b16 %v1481
    %v2185 = vunpack.c.l.b16 %v1482
    %v2186 = vunpack.c.h.b16 %v1482
    %v2187 = vunpack.c.l.b16 %v1483
    %v2188 = vpack.c.b16 %v1747, %v1740
    %v2189 = vpack.c.b16 %v1748, %v1741
    %v2190 = vpack.c.b16 %v1749, %v1742
    %v2191 = vpack.c.b16 %v1750, %v1743
    %v2192 = vpack.c.b16 %v1751, %v1744
    %v2193 = vpack.c.b16 %v1752, %v1745
    %v2194 = vpack.c.b16 %v1753, %v1746
    %v2195 = vpack.c.b16 %v1761, %v1754
    %v2196 = vpack.c.b16 %v1762, %v1755
    %v2197 = vpack.c.b16 %v1763, %v1756
    %v2198 = vpack.c.b16 %v1764, %v1757
    %v2199 = vpack.c.b16 %v1765, %v1758
    %v2200 = vpack.c.b16 %v1766, %v1759
    %v2201 = vpack.c.b16 %v1767, %v1760
    %v2202 = vpack.c.b16 %v1775, %v1768
    %v2203 = vpack.c.b16 %v1776, %v1769
    %v2204 = vpack.c.b16 %v1777, %v1770
    %v2205 = vpack.c.b16 %v1778, %v1771
    %v2206 = vpack.c.b16 %v1779, %v1772
    %v2207 = vpack.c.b16 %v1780, %v1773
    %v2208 = vpack.c.b16 %v1781, %v1774
    %v2209 = vpack.c.b16 %v1789, %v1782
    %v2210 = vpack.c.b16 %v1790, %v1783
    %v2211 = vpack.c.b16 %v1791, %v1784
    %v2212 = vpack.c.b16 %v1792, %v1785
    %v2213 = vpack.c.b16 %v1793, %v1786
    %v2214 = vpack.c.b16 %v1794, %v1787
    %v2215 = vpack.c.b16 %v1795, %v1788
    %v2216 = vpack.c.b16 %v1803, %v1796
    %v2217 = vpack.c.b16 %v1804, %v1797
    %v2218 = vpack.c.b16 %v1805, %v1798
    %v2219 = vpack.c.b16 %v1806, %v1799
    %v2220 = vpack.c.b16 %v1807, %v1800
    %v2221 = vpack.c.b16 %v1808, %v1801
    %v2222 = vpack.c.b16 %v1809, %v1802
    %v2223 = vpack.c.b16 %v1817, %v1810
    %v2224 = vpack.c.b16 %v1818, %v1811
    %v2225 = vpack.c.b16 %v1819, %v1812
    %v2226 = vpack.c.b16 %v1820, %v1813
    %v2227 = vpack.c.b16 %v1821, %v1814
    %v2228 = vpack.c.b16 %v1822, %v1815
    %v2229 = vpack.c.b16 %v1823, %v1816
    %v2230 = vpack.c.b16 %v1831, %v1824
    %v2231 = vpack.c.b16 %v1832, %v1825
    %v2232 = vpack.c.b16 %v1833, %v1826
    %v2233 = vpack.c.b16 %v1834, %v1827
    %v2234 = vpack.c.b16 %v1835, %v1828
    %v2235 = vpack.c.b16 %v1836, %v1829
    %v2236 = vpack.c.b16 %v1837, %v1830
    %v2237 = vpack.c.b16 %v1845, %v1838
    %v2238 = vpack.c.b16 %v1846, %v1839
    %v2239 = vpack.c.b16 %v1847, %v1840
    %v2240 = vpack.c.b16 %v1848, %v1841
    %v2241 = vpack.c.b16 %v1849, %v1842
    %v2242 = vpack.c.b16 %v1850, %v1843
    %v2243 = vpack.c.b16 %v1851, %v1844
    %v2244 = vpack.c.b16 %v1859, %v1852
    %v2245 = vpack.c.b16 %v1860, %v1853
    %v2246 = vpack.c.b16 %v1861, %v1854
    %v2247 = vpack.c.b16 %v1862, %v1855
    %v2248 = vpack.c.b16 %v1863, %v1856
    %v2249 = vpack.c.b16 %v1864, %v1857
    %v2250 = vpack.c.b16 %v1865, %v1858
    %v2251 = vpack.c.b16 %v1873, %v1866
    %v2252 = vpack.c.b16 %v1874, %v1867
    %v2253 = vpack.c.b16 %v1875, %v1868
    %v2254 = vpack.c.b16 %v1876, %v1869
    %v2255 = vpack.c.b16 %v1877, %v1870
    %v2256 = vpack.c.b16 %v1878, %v1871
    %v2257 = vpack.c.b16 %v1879, %v1872
    %v2258 = vpack.c.b16 %v1887, %v1880
    %v2259 = vpack.c.b16 %v1888, %v1881
    %v2260 = vpack.c.b16 %v1889, %v1882
    %v2261 = vpack.c.b16 %v1890, %v1883
    %v2262 = vpack.c.b16 %v1891, %v1884
    %v2263 = vpack.c.b16 %v1892, %v1885
    %v2264 = vpack.c.b16 %v1893, %v1886
    %v2265 = vpack.c.b16 %v1901, %v1894
    %v2266 = vpack.c.b16 %v1902, %v1895
    %v2267 = vpack.c.b16 %v1903, %v1896
    %v2268 = vpack.c.b16 %v1904, %v1897
    %v2269 = vpack.c.b16 %v1905, %v1898
    %v2270 = vpack.c.b16 %v1906, %v1899
    %v2271 = vpack.c.b16 %v1907, %v1900
    %v2272 = vpack.c.b16 %v1915, %v1908
    %v2273 = vpack.c.b16 %v1916, %v1909
    %v2274 = vpack.c.b16 %v1917, %v1910
    %v2275 = vpack.c.b16 %v1918, %v1911
    %v2276 = vpack.c.b16 %v1919, %v1912
    %v2277 = vpack.c.b16 %v1920, %v1913
    %v2278 = vpack.c.b16 %v1921, %v1914
    %v2279 = vpack.c.b16 %v1929, %v1922
    %v2280 = vpack.c.b16 %v1930, %v1923
    %v2281 = vpack.c.b16 %v1931, %v1924
    %v2282 = vpack.c.b16 %v1932, %v1925
    %v2283 = vpack.c.b16 %v1933, %v1926
    %v2284 = vpack.c.b16 %v1934, %v1927
    %v2285 = vpack.c.b16 %v1935, %v1928
    %v2286 = vpack.c.b16 %v1943, %v1936
    %v2287 = vpack.c.b16 %v1944, %v1937
    %v2288 = vpack.c.b16 %v1945, %v1938
    %v2289 = vpack.c.b16 %v1946, %v1939
    %v2290 = vpack.c.b16 %v1947, %v1940
    %v2291 = vpack.c.b16 %v1948, %v1941
    %v2292 = vpack.c.b16 %v1949, %v1942
    %v2293 = vpack.c.b16 %v1957, %v1950
    %v2294 = vpack.c.b16 %v1958, %v1951
    %v2295 = vpack.c.b16 %v1959, %v1952
    %v2296 = vpack.c.b16 %v1960, %v1953
    %v2297 = vpack.c.b16 %v1961, %v1954
    %v2298 = vpack.c.b16 %v1962, %v1955
    %v2299 = vpack.c.b16 %v1963, %v1956
    %v2300 = vpack.c.b16 %v1971, %v1964
    %v2301 = vpack.c.b16 %v1972, %v1965
    %v2302 = vpack.c.b16 %v1973, %v1966
    %v2303 = vpack.c.b16 %v1974, %v1967
    %v2304 = vpack.c.b16 %v1975, %v1968
    %v2305 = vpack.c.b16 %v1976, %v1969
    %v2306 = vpack.c.b16 %v1977, %v1970
    %v2307 = vpack.c.b16 %v1985, %v1978
    %v2308 = vpack.c.b16 %v1986, %v1979
    %v2309 = vpack.c.b16 %v1987, %v1980
    %v2310 = vpack.c.b16 %v1988, %v1981
    %v2311 = vpack.c.b16 %v1989, %v1982
    %v2312 = vpack.c.b16 %v1990, %v1983
    %v2313 = vpack.c.b16 %v1991, %v1984
    %v2314 = vpack.c.b16 %v1999, %v1992
    %v2315 = vpack.c.b16 %v2000, %v1993
    %v2316 = vpack.c.b16 %v2001, %v1994
    %v2317 = vpack.c.b16 %v2002, %v1995
    %v2318 = vpack.c.b16 %v2003, %v1996
    %v2319 = vpack.c.b16 %v2004, %v1997
    %v2320 = vpack.c.b16 %v2005, %v1998
    %v2321 = vpack.c.b16 %v2013, %v2006
    %v2322 = vpack.c.b16 %v2014, %v2007
    %v2323 = vpack.c.b16 %v2015, %v2008
    %v2324 = vpack.c.b16 %v2016, %v2009
    %v2325 = vpack.c.b16 %v2017, %v2010
    %v2326 = vpack.c.b16 %v2018, %v2011
    %v2327 = vpack.c.b16 %v2019, %v2012
    %v2328 = vpack.c.b16 %v2027, %v2020
    %v2329 = vpack.c.b16 %v2028, %v2021
    %v2330 = vpack.c.b16 %v2029, %v2022
    %v2331 = vpack.c.b16 %v2030, %v2023
    %v2332 = vpack.c.b16 %v2031, %v2024
    %v2333 = vpack.c.b16 %v2032, %v2025
    %v2334 = vpack.c.b16 %v2033, %v2026
    %v2335 = vpack.c.b16 %v2041, %v2034
    %v2336 = vpack.c.b16 %v2042, %v2035
    %v2337 = vpack.c.b16 %v2043, %v2036
    %v2338 = vpack.c.b16 %v2044, %v2037
    %v2339 = vpack.c.b16 %v2045, %v2038
    %v2340 = vpack.c.b16 %v2046, %v2039
    %v2341 = vpack.c.b16 %v2047, %v2040
    %v2342 = vpack.c.b16 %v2055, %v2048
    %v2343 = vpack.c.b16 %v2056, %v2049
    %v2344 = vpack.c.b16 %v2057, %v2050
    %v2345 = vpack.c.b16 %v2058, %v2051
    %v2346 = vpack.c.b16 %v2059, %v2052
    %v2347 = vpack.c.b16 %v2060, %v2053
    %v2348 = vpack.c.b16 %v2061, %v2054
    %v2349 = vpack.c.b16 %v2069, %v2062
    %v2350 = vpack.c.b16 %v2070, %v2063
    %v2351 = vpack.c.b16 %v2071, %v2064
    %v2352 = vpack.c.b16 %v2072, %v2065
    %v2353 = vpack.c.b16 %v2073, %v2066
    %v2354 = vpack.c.b16 %v2074, %v2067
    %v2355 = vpack.c.b16 %v2075, %v2068
    %v2356 = vpack.c.b16 %v2083, %v2076
    %v2357 = vpack.c.b16 %v2084, %v2077
    %v2358 = vpack.c.b16 %v2085, %v2078
    %v2359 = vpack.c.b16 %v2086, %v2079
    %v2360 = vpack.c.b16 %v2087, %v2080
    %v2361 = vpack.c.b16 %v2088, %v2081
    %v2362 = vpack.c.b16 %v2089, %v2082
    %v2363 = vpack.c.b16 %v2097, %v2090
    %v2364 = vpack.c.b16 %v2098, %v2091
    %v2365 = vpack.c.b16 %v2099, %v2092
    %v2366 = vpack.c.b16 %v2100, %v2093
    %v2367 = vpack.c.b16 %v2101, %v2094
    %v2368 = vpack.c.b16 %v2102, %v2095
    %v2369 = vpack.c.b16 %v2103, %v2096
    %v2370 = vpack.c.b16 %v2111, %v2104
    %v2371 = vpack.c.b16 %v2112, %v2105
    %v2372 = vpack.c.b16 %v2113, %v2106
    %v2373 = vpack.c.b16 %v2114, %v2107
    %v2374 = vpack.c.b16 %v2115, %v2108
    %v2375 = vpack.c.b16 %v2116, %v2109
    %v2376 = vpack.c.b16 %v2117, %v2110
    %v2377 = vpack.c.b16 %v2125, %v2118
    %v2378 = vpack.c.b16 %v2126, %v2119
    %v2379 = vpack.c.b16 %v2127, %v2120
    %v2380 = vpack.c.b16 %v2128, %v2121
    %v2381 = vpack.c.b16 %v2129, %v2122
    %v2382 = vpack.c.b16 %v2130, %v2123
    %v2383 = vpack.c.b16 %v2131, %v2124
    %v2384 = vpack.c.b16 %v2139, %v2132
    %v2385 = vpack.c.b16 %v2140, %v2133
    %v2386 = vpack.c.b16 %v2141, %v2134
    %v2387 = vpack.c.b16 %v2142, %v2135
    %v2388 = vpack.c.b16 %v2143, %v2136
    %v2389 = vpack.c.b16 %v2144, %v2137
    %v2390 = vpack.c.b16 %v2145, %v2138
    %v2391 = vpack.c.b16 %v2153, %v2146
    %v2392 = vpack.c.b16 %v2154, %v2147
    %v2393 = vpack.c.b16 %v2155, %v2148
    %v2394 = vpack.c.b16 %v2156, %v2149
    %v2395 = vpack.c.b16 %v2157, %v2150
    %v2396 = vpack.c.b16 %v2158, %v2151
    %v2397 = vpack.c.b16 %v2159, %v2152
    %v2398 = vpack.c.b16 %v2167, %v2160
    %v2399 = vpack.c.b16 %v2168, %v2161
    %v2400 = vpack.c.b16 %v2169, %v2162
    %v2401 = vpack.c.b16 %v2170, %v2163
    %v2402 = vpack.c.b16 %v2171, %v2164
    %v2403 = vpack.c.b16 %v2172, %v2165
    %v2404 = vpack.c.b16 %v2173, %v2166
    %v2405 = vpack.c.b16 %v2181, %v2174
    %v2406 = vpack.c.b16 %v2182, %v2175
    %v2407 = vpack.c.b16 %v2183, %v2176
    %v2408 = vpack.c.b16 %v2184, %v2177
    %v2409 = vpack.c.b16 %v2185, %v2178
    %v2410 = vpack.c.b16 %v2186, %v2179
    %v2411 = vpack.c.b16 %v2187, %v2180
    %2636 = vmatprep.subr.bf16.mxu0 %v2238
    %2637 = vmatpush1.bf16.msra.mxu0 %v2237
    %2638 = vmatprep.subr.bf16.mxu0 %v2231
    %2639 = vmatpush1.bf16.msra.mxu0 %v2230
    %2640 = vmatprep.subr.bf16.mxu0 %v2224
    %2641 = vmatpush1.bf16.msra.mxu0 %v2223
    %2642 = vmatprep.subr.bf16.mxu0 %v2217
    %2643 = vmatpush1.bf16.msra.mxu0 %v2216
    %2644 = vmatprep.subr.bf16.mxu0 %v2210
    %2645 = vmatpush1.bf16.msra.mxu0 %v2209
    %2646 = vmatprep.subr.bf16.mxu0 %v2203
    %2647 = vmatpush1.bf16.msra.mxu0 %v2202
    %2648 = vmatprep.subr.bf16.mxu0 %v2196
    %2649 = vmatpush1.bf16.msra.mxu0 %v2195
    %2650 = vmatprep.subr.bf16.mxu0 %v2189
    %2651 = vmatpush1.bf16.msra.mxu0 %v2188
    %2652 = vmatprep.subr.bf16.mxu0 %v2294
    %2653 = vmatpush2.bf16.msra.mxu0 %v2293
    %2654 = vmatprep.subr.bf16.mxu0 %v2287
    %2655 = vmatpush2.bf16.msra.mxu0 %v2286
    %2656 = vmatprep.subr.bf16.mxu0 %v2280
    %2657 = vmatpush2.bf16.msra.mxu0 %v2279
    %2658 = vmatprep.subr.bf16.mxu0 %v2273
    %2659 = vmatpush2.bf16.msra.mxu0 %v2272
    %2660 = vmatprep.subr.bf16.mxu0 %v2266
    %2661 = vmatpush2.bf16.msra.mxu0 %v2265
    %2662 = vmatprep.subr.bf16.mxu0 %v2259
    %2663 = vmatpush2.bf16.msra.mxu0 %v2258
    %2664 = vmatprep.subr.bf16.mxu0 %v2252
    %2665 = vmatpush2.bf16.msra.mxu0 %v2251
    %2666 = vmatprep.subr.bf16.mxu0 %v2245
    %2667 = vmatpush2.bf16.msra.mxu0 %v2244
    %2668 = vmatprep.mubr.bf16.mxu0 %v1225
    %2669 = vmatmul.mubr.bf16.gmra.mxu0 %v1224
    %v2670 = vpop.f32.mrf.mxu0
    %v2671 = vadd.f32 0.0, %v2670
    %v2672 = vpop.f32.mrf.mxu0
    %v2673 = vadd.f32 0.0, %v2672
    %v2674 = vpop.f32.mrf.mxu0
    %v2675 = vpop.f32.mrf.mxu0
    %2676 = vdwg.mxu0
    %2677 = vmatprep.subr.bf16.mxu0 %v2350
    %2678 = vmatpush1.bf16.msra.mxu0 %v2349
    %2679 = vmatprep.subr.bf16.mxu0 %v2343
    %2680 = vmatpush1.bf16.msra.mxu0 %v2342
    %2681 = vmatprep.subr.bf16.mxu0 %v2336
    %2682 = vmatpush1.bf16.msra.mxu0 %v2335
    %2683 = vmatprep.subr.bf16.mxu0 %v2329
    %2684 = vmatpush1.bf16.msra.mxu0 %v2328
    %2685 = vmatprep.subr.bf16.mxu0 %v2322
    %2686 = vmatpush1.bf16.msra.mxu0 %v2321
    %2687 = vmatprep.subr.bf16.mxu0 %v2315
    %2688 = vmatpush1.bf16.msra.mxu0 %v2314
    %2689 = vmatprep.subr.bf16.mxu0 %v2308
    %2690 = vmatpush1.bf16.msra.mxu0 %v2307
    %2691 = vmatprep.subr.bf16.mxu0 %v2301
    %2692 = vmatpush1.bf16.msra.mxu0 %v2300
    %2693 = vmatprep.subr.bf16.mxu0 %v2406
    %2694 = vmatpush2.bf16.msra.mxu0 %v2405
    %2695 = vmatprep.subr.bf16.mxu0 %v2399
    %2696 = vmatpush2.bf16.msra.mxu0 %v2398
    %2697 = vmatprep.subr.bf16.mxu0 %v2392
    %2698 = vmatpush2.bf16.msra.mxu0 %v2391
    %2699 = vmatprep.subr.bf16.mxu0 %v2385
    %2700 = vmatpush2.bf16.msra.mxu0 %v2384
    %2701 = vmatprep.subr.bf16.mxu0 %v2378
    %2702 = vmatpush2.bf16.msra.mxu0 %v2377
    %2703 = vmatprep.subr.bf16.mxu0 %v2371
    %2704 = vmatpush2.bf16.msra.mxu0 %v2370
    %2705 = vmatprep.subr.bf16.mxu0 %v2364
    %2706 = vmatpush2.bf16.msra.mxu0 %v2363
    %2707 = vmatprep.subr.bf16.mxu0 %v2357
    %2708 = vmatpush2.bf16.msra.mxu0 %v2356
    %2709 = vmatprep.mubr.bf16.mxu0 %v1227
    %2710 = vmatmul.mubr.bf16.gmra.mxu0 %v1226
    %v2711 = vpop.f32.mrf.mxu0
    %v2712 = vadd.f32 %v2671, %v2711
    %v2713 = vpop.f32.mrf.mxu0
    %v2714 = vadd.f32 %v2673, %v2713
    %v2715 = vpop.f32.mrf.mxu0
    %v2716 = vpop.f32.mrf.mxu0
    %2717 = vdwg.mxu0
    %2718 = vmatprep.subr.bf16.mxu0 %v2240
    %2719 = vmatpush1.bf16.msra.mxu0 %v2239
    %2720 = vmatprep.subr.bf16.mxu0 %v2233
    %2721 = vmatpush1.bf16.msra.mxu0 %v2232
    %2722 = vmatprep.subr.bf16.mxu0 %v2226
    %2723 = vmatpush1.bf16.msra.mxu0 %v2225
    %2724 = vmatprep.subr.bf16.mxu0 %v2219
    %2725 = vmatpush1.bf16.msra.mxu0 %v2218
    %2726 = vmatprep.subr.bf16.mxu0 %v2212
    %2727 = vmatpush1.bf16.msra.mxu0 %v2211
    %2728 = vmatprep.subr.bf16.mxu0 %v2205
    %2729 = vmatpush1.bf16.msra.mxu0 %v2204
    %2730 = vmatprep.subr.bf16.mxu0 %v2198
    %2731 = vmatpush1.bf16.msra.mxu0 %v2197
    %2732 = vmatprep.subr.bf16.mxu0 %v2191
    %2733 = vmatpush1.bf16.msra.mxu0 %v2190
    %2734 = vmatprep.subr.bf16.mxu0 %v2296
    %2735 = vmatpush2.bf16.msra.mxu0 %v2295
    %2736 = vmatprep.subr.bf16.mxu0 %v2289
    %2737 = vmatpush2.bf16.msra.mxu0 %v2288
    %2738 = vmatprep.subr.bf16.mxu0 %v2282
    %2739 = vmatpush2.bf16.msra.mxu0 %v2281
    %2740 = vmatprep.subr.bf16.mxu0 %v2275
    %2741 = vmatpush2.bf16.msra.mxu0 %v2274
    %2742 = vmatprep.subr.bf16.mxu0 %v2268
    %2743 = vmatpush2.bf16.msra.mxu0 %v2267
    %2744 = vmatprep.subr.bf16.mxu0 %v2261
    %2745 = vmatpush2.bf16.msra.mxu0 %v2260
    %2746 = vmatprep.subr.bf16.mxu0 %v2254
    %2747 = vmatpush2.bf16.msra.mxu0 %v2253
    %2748 = vmatprep.subr.bf16.mxu0 %v2247
    %2749 = vmatpush2.bf16.msra.mxu0 %v2246
    %2750 = vmatprep.mubr.bf16.mxu0 %v1225
    %2751 = vmatmul.mubr.bf16.gmra.mxu0 %v1224
    %v2752 = vpop.f32.mrf.mxu0
    %v2753 = vadd.f32 0.0, %v2752
    %v2754 = vpop.f32.mrf.mxu0
    %v2755 = vadd.f32 0.0, %v2754
    %v2756 = vpop.f32.mrf.mxu0
    %v2757 = vpop.f32.mrf.mxu0
    %2758 = vdwg.mxu0
    %2759 = vmatprep.subr.bf16.mxu0 %v2352
    %2760 = vmatpush1.bf16.msra.mxu0 %v2351
    %2761 = vmatprep.subr.bf16.mxu0 %v2345
    %2762 = vmatpush1.bf16.msra.mxu0 %v2344
    %2763 = vmatprep.subr.bf16.mxu0 %v2338
    %2764 = vmatpush1.bf16.msra.mxu0 %v2337
    %2765 = vmatprep.subr.bf16.mxu0 %v2331
    %2766 = vmatpush1.bf16.msra.mxu0 %v2330
    %2767 = vmatprep.subr.bf16.mxu0 %v2324
    %2768 = vmatpush1.bf16.msra.mxu0 %v2323
    %2769 = vmatprep.subr.bf16.mxu0 %v2317
    %2770 = vmatpush1.bf16.msra.mxu0 %v2316
    %2771 = vmatprep.subr.bf16.mxu0 %v2310
    %2772 = vmatpush1.bf16.msra.mxu0 %v2309
    %2773 = vmatprep.subr.bf16.mxu0 %v2303
    %2774 = vmatpush1.bf16.msra.mxu0 %v2302
    %2775 = vmatprep.subr.bf16.mxu0 %v2408
    %2776 = vmatpush2.bf16.msra.mxu0 %v2407
    %2777 = vmatprep.subr.bf16.mxu0 %v2401
    %2778 = vmatpush2.bf16.msra.mxu0 %v2400
    %2779 = vmatprep.subr.bf16.mxu0 %v2394
    %2780 = vmatpush2.bf16.msra.mxu0 %v2393
    %2781 = vmatprep.subr.bf16.mxu0 %v2387
    %2782 = vmatpush2.bf16.msra.mxu0 %v2386
    %2783 = vmatprep.subr.bf16.mxu0 %v2380
    %2784 = vmatpush2.bf16.msra.mxu0 %v2379
    %2785 = vmatprep.subr.bf16.mxu0 %v2373
    %2786 = vmatpush2.bf16.msra.mxu0 %v2372
    %2787 = vmatprep.subr.bf16.mxu0 %v2366
    %2788 = vmatpush2.bf16.msra.mxu0 %v2365
    %2789 = vmatprep.subr.bf16.mxu0 %v2359
    %2790 = vmatpush2.bf16.msra.mxu0 %v2358
    %2791 = vmatprep.mubr.bf16.mxu0 %v1227
    %2792 = vmatmul.mubr.bf16.gmra.mxu0 %v1226
    %v2793 = vpop.f32.mrf.mxu0
    %v2794 = vadd.f32 %v2753, %v2793
    %v2795 = vpop.f32.mrf.mxu0
    %v2796 = vadd.f32 %v2755, %v2795
    %v2797 = vpop.f32.mrf.mxu0
    %v2798 = vpop.f32.mrf.mxu0
    %2799 = vdwg.mxu0
    %2800 = vmatprep.subr.bf16.mxu0 %v2242
    %2801 = vmatpush1.bf16.msra.mxu0 %v2241
    %2802 = vmatprep.subr.bf16.mxu0 %v2235
    %2803 = vmatpush1.bf16.msra.mxu0 %v2234
    %2804 = vmatprep.subr.bf16.mxu0 %v2228
    %2805 = vmatpush1.bf16.msra.mxu0 %v2227
    %2806 = vmatprep.subr.bf16.mxu0 %v2221
    %2807 = vmatpush1.bf16.msra.mxu0 %v2220
    %2808 = vmatprep.subr.bf16.mxu0 %v2214
    %2809 = vmatpush1.bf16.msra.mxu0 %v2213
    %2810 = vmatprep.subr.bf16.mxu0 %v2207
    %2811 = vmatpush1.bf16.msra.mxu0 %v2206
    %2812 = vmatprep.subr.bf16.mxu0 %v2200
    %2813 = vmatpush1.bf16.msra.mxu0 %v2199
    %2814 = vmatprep.subr.bf16.mxu0 %v2193
    %2815 = vmatpush1.bf16.msra.mxu0 %v2192
    %2816 = vmatprep.subr.bf16.mxu0 %v2298
    %2817 = vmatpush2.bf16.msra.mxu0 %v2297
    %2818 = vmatprep.subr.bf16.mxu0 %v2291
    %2819 = vmatpush2.bf16.msra.mxu0 %v2290
    %2820 = vmatprep.subr.bf16.mxu0 %v2284
    %2821 = vmatpush2.bf16.msra.mxu0 %v2283
    %2822 = vmatprep.subr.bf16.mxu0 %v2277
    %2823 = vmatpush2.bf16.msra.mxu0 %v2276
    %2824 = vmatprep.subr.bf16.mxu0 %v2270
    %2825 = vmatpush2.bf16.msra.mxu0 %v2269
    %2826 = vmatprep.subr.bf16.mxu0 %v2263
    %2827 = vmatpush2.bf16.msra.mxu0 %v2262
    %2828 = vmatprep.subr.bf16.mxu0 %v2256
    %2829 = vmatpush2.bf16.msra.mxu0 %v2255
    %2830 = vmatprep.subr.bf16.mxu0 %v2249
    %2831 = vmatpush2.bf16.msra.mxu0 %v2248
    %2832 = vmatprep.mubr.bf16.mxu0 %v1225
    %2833 = vmatmul.mubr.bf16.gmra.mxu0 %v1224
    %v2834 = vpop.f32.mrf.mxu0
    %v2835 = vadd.f32 0.0, %v2834
    %v2836 = vpop.f32.mrf.mxu0
    %v2837 = vadd.f32 0.0, %v2836
    %v2838 = vpop.f32.mrf.mxu0
    %v2839 = vpop.f32.mrf.mxu0
    %2840 = vdwg.mxu0
    %2841 = vmatprep.subr.bf16.mxu0 %v2354
    %2842 = vmatpush1.bf16.msra.mxu0 %v2353
    %2843 = vmatprep.subr.bf16.mxu0 %v2347
    %2844 = vmatpush1.bf16.msra.mxu0 %v2346
    %2845 = vmatprep.subr.bf16.mxu0 %v2340
    %2846 = vmatpush1.bf16.msra.mxu0 %v2339
    %2847 = vmatprep.subr.bf16.mxu0 %v2333
    %2848 = vmatpush1.bf16.msra.mxu0 %v2332
    %2849 = vmatprep.subr.bf16.mxu0 %v2326
    %2850 = vmatpush1.bf16.msra.mxu0 %v2325
    %2851 = vmatprep.subr.bf16.mxu0 %v2319
    %2852 = vmatpush1.bf16.msra.mxu0 %v2318
    %2853 = vmatprep.subr.bf16.mxu0 %v2312
    %2854 = vmatpush1.bf16.msra.mxu0 %v2311
    %2855 = vmatprep.subr.bf16.mxu0 %v2305
    %2856 = vmatpush1.bf16.msra.mxu0 %v2304
    %2857 = vmatprep.subr.bf16.mxu0 %v2410
    %2858 = vmatpush2.bf16.msra.mxu0 %v2409
    %2859 = vmatprep.subr.bf16.mxu0 %v2403
    %2860 = vmatpush2.bf16.msra.mxu0 %v2402
    %2861 = vmatprep.subr.bf16.mxu0 %v2396
    %2862 = vmatpush2.bf16.msra.mxu0 %v2395
    %2863 = vmatprep.subr.bf16.mxu0 %v2389
    %2864 = vmatpush2.bf16.msra.mxu0 %v2388
    %2865 = vmatprep.subr.bf16.mxu0 %v2382
    %2866 = vmatpush2.bf16.msra.mxu0 %v2381
    %2867 = vmatprep.subr.bf16.mxu0 %v2375
    %2868 = vmatpush2.bf16.msra.mxu0 %v2374
    %2869 = vmatprep.subr.bf16.mxu0 %v2368
    %2870 = vmatpush2.bf16.msra.mxu0 %v2367
    %2871 = vmatprep.subr.bf16.mxu0 %v2361
    %2872 = vmatpush2.bf16.msra.mxu0 %v2360
    %2873 = vmatprep.mubr.bf16.mxu0 %v1227
    %2874 = vmatmul.mubr.bf16.gmra.mxu0 %v1226
    %v2875 = vpop.f32.mrf.mxu0
    %v2876 = vadd.f32 %v2835, %v2875
    %v2877 = vpop.f32.mrf.mxu0
    %v2878 = vadd.f32 %v2837, %v2877
    %v2879 = vpop.f32.mrf.mxu0
    %v2880 = vpop.f32.mrf.mxu0
    %2881 = vdwg.mxu0
    %2882 = vmatprep.subr.bf16.mxu0 0
    %2883 = vmatpush1.bf16.msra.mxu0 %v2243
    %2884 = vmatprep.subr.bf16.mxu0 0
    %2885 = vmatpush1.bf16.msra.mxu0 %v2236
    %2886 = vmatprep.subr.bf16.mxu0 0
    %2887 = vmatpush1.bf16.msra.mxu0 %v2229
    %2888 = vmatprep.subr.bf16.mxu0 0
    %2889 = vmatpush1.bf16.msra.mxu0 %v2222
    %2890 = vmatprep.subr.bf16.mxu0 0
    %2891 = vmatpush1.bf16.msra.mxu0 %v2215
    %2892 = vmatprep.subr.bf16.mxu0 0
    %2893 = vmatpush1.bf16.msra.mxu0 %v2208
    %2894 = vmatprep.subr.bf16.mxu0 0
    %2895 = vmatpush1.bf16.msra.mxu0 %v2201
    %2896 = vmatprep.subr.bf16.mxu0 0
    %2897 = vmatpush1.bf16.msra.mxu0 %v2194
    %2898 = vmatprep.subr.bf16.mxu0 0
    %2899 = vmatpush2.bf16.msra.mxu0 %v2299
    %2900 = vmatprep.subr.bf16.mxu0 0
    %2901 = vmatpush2.bf16.msra.mxu0 %v2292
    %2902 = vmatprep.subr.bf16.mxu0 0
    %2903 = vmatpush2.bf16.msra.mxu0 %v2285
    %2904 = vmatprep.subr.bf16.mxu0 0
    %2905 = vmatpush2.bf16.msra.mxu0 %v2278
    %2906 = vmatprep.subr.bf16.mxu0 0
    %2907 = vmatpush2.bf16.msra.mxu0 %v2271
    %2908 = vmatprep.subr.bf16.mxu0 0
    %2909 = vmatpush2.bf16.msra.mxu0 %v2264
    %2910 = vmatprep.subr.bf16.mxu0 0
    %2911 = vmatpush2.bf16.msra.mxu0 %v2257
    %2912 = vmatprep.subr.bf16.mxu0 0
    %2913 = vmatpush2.bf16.msra.mxu0 %v2250
    %2914 = vmatprep.mubr.bf16.mxu0 %v1225
    %2915 = vmatmul.mubr.bf16.gmra.mxu0 %v1224
    %v2916 = vpop.f32.mrf.mxu0
    %v2917 = vadd.f32 0.0, %v2916
    %v2918 = vpop.f32.mrf.mxu0
    %v2919 = vpop.f32.mrf.mxu0
    %v2920 = vpop.f32.mrf.mxu0
    %2921 = vdwg.mxu0
    %2922 = vmatprep.subr.bf16.mxu0 0
    %2923 = vmatpush1.bf16.msra.mxu0 %v2355
    %2924 = vmatprep.subr.bf16.mxu0 0
    %2925 = vmatpush1.bf16.msra.mxu0 %v2348
    %2926 = vmatprep.subr.bf16.mxu0 0
    %2927 = vmatpush1.bf16.msra.mxu0 %v2341
    %2928 = vmatprep.subr.bf16.mxu0 0
    %2929 = vmatpush1.bf16.msra.mxu0 %v2334
    %2930 = vmatprep.subr.bf16.mxu0 0
    %2931 = vmatpush1.bf16.msra.mxu0 %v2327
    %2932 = vmatprep.subr.bf16.mxu0 0
    %2933 = vmatpush1.bf16.msra.mxu0 %v2320
    %2934 = vmatprep.subr.bf16.mxu0 0
    %2935 = vmatpush1.bf16.msra.mxu0 %v2313
    %2936 = vmatprep.subr.bf16.mxu0 0
    %2937 = vmatpush1.bf16.msra.mxu0 %v2306
    %2938 = vmatprep.subr.bf16.mxu0 0
    %2939 = vmatpush2.bf16.msra.mxu0 %v2411
    %2940 = vmatprep.subr.bf16.mxu0 0
    %2941 = vmatpush2.bf16.msra.mxu0 %v2404
    %2942 = vmatprep.subr.bf16.mxu0 0
    %2943 = vmatpush2.bf16.msra.mxu0 %v2397
    %2944 = vmatprep.subr.bf16.mxu0 0
    %2945 = vmatpush2.bf16.msra.mxu0 %v2390
    %2946 = vmatprep.subr.bf16.mxu0 0
    %2947 = vmatpush2.bf16.msra.mxu0 %v2383
    %2948 = vmatprep.subr.bf16.mxu0 0
    %2949 = vmatpush2.bf16.msra.mxu0 %v2376
    %2950 = vmatprep.subr.bf16.mxu0 0
    %2951 = vmatpush2.bf16.msra.mxu0 %v2369
    %2952 = vmatprep.subr.bf16.mxu0 0
    %2953 = vmatpush2.bf16.msra.mxu0 %v2362
    %2954 = vmatprep.mubr.bf16.mxu0 %v1227
    %2955 = vmatmul.mubr.bf16.gmra.mxu0 %v1226
    %v2956 = vpop.f32.mrf.mxu0
    %v2957 = vadd.f32 %v2917, %v2956
    %v2958 = vpop.f32.mrf.mxu0
    %v2959 = vpop.f32.mrf.mxu0
    %v2960 = vpop.f32.mrf.mxu0
    %2961 = vdwg.mxu0
    %v2962 = vpack.c.bf16 %v2712, %v2712
    %v2963 = vpack.c.bf16 %v2714, %v2714
    %v2964 = vpack.c.bf16 %v2794, %v2794
    %v2965 = vpack.c.bf16 %v2796, %v2796
    %v2966 = vpack.c.bf16 %v2876, %v2876
    %v2967 = vpack.c.bf16 %v2878, %v2878
    %v2968 = vpack.c.bf16 %v2957, %v2957
    %v2969 = vld [vmem:[%s6] sm:$0x7f]
    %v2971 = vlaneseq
    %v2972 = vshrl.u32 %v2971, 7
    %v2973 = vsub.s32 0, %v2972
    %v2974 = vrot.slane %v2969, %v2973
    %v2975 = vlaneseq
    %v2976 = vshrl.u32 %v2975, 7
    %v2977 = vsub.s32 1, %v2976
    %v2978 = vrot.slane %v2969, %v2977
    %v2979 = vlaneseq
    %v2980 = vshrl.u32 %v2979, 7
    %v2981 = vsub.s32 2, %v2980
    %v2982 = vrot.slane %v2969, %v2981
    %v2983 = vlaneseq
    %v2984 = vshrl.u32 %v2983, 7
    %v2985 = vsub.s32 3, %v2984
    %v2986 = vrot.slane %v2969, %v2985
    %v2987 = vlaneseq
    %v2988 = vshrl.u32 %v2987, 7
    %v2989 = vsub.s32 4, %v2988
    %v2990 = vrot.slane %v2969, %v2989
    %v2991 = vlaneseq
    %v2992 = vshrl.u32 %v2991, 7
    %v2993 = vsub.s32 5, %v2992
    %v2994 = vrot.slane %v2969, %v2993
    %v2995 = vlaneseq
    %v2996 = vshrl.u32 %v2995, 7
    %v2997 = vsub.s32 6, %v2996
    %v2998 = vrot.slane %v2969, %v2997
    %v3006 = vpack.c.bf16 %v2974, %v2974
    %v3007 = vpack.c.bf16 %v2978, %v2978
    %v3008 = vpack.c.bf16 %v2982, %v2982
    %v3009 = vpack.c.bf16 %v2986, %v2986
    %v3010 = vpack.c.bf16 %v2990, %v2990
    %v3011 = vpack.c.bf16 %v2994, %v2994
    %v3012 = vpack.c.bf16 %v2998, %v2998
    %v3014 = vpack.i.b16 %v3006, %v3006
    %v3016 = vlaneseq
    %v3017 = vshrl.u32 %v3016, 7
    %v3018 = vsub.s32 0, %v3017
    %v3019 = vrot.slane %v3014, %v3018
    %v3021 = vpack.i.b16 %v3007, %v3007
    %v3023 = vlaneseq
    %v3024 = vshrl.u32 %v3023, 7
    %v3025 = vsub.s32 0, %v3024
    %v3026 = vrot.slane %v3021, %v3025
    %v3028 = vpack.i.b16 %v3008, %v3008
    %v3030 = vlaneseq
    %v3031 = vshrl.u32 %v3030, 7
    %v3032 = vsub.s32 0, %v3031
    %v3033 = vrot.slane %v3028, %v3032
    %v3035 = vpack.i.b16 %v3009, %v3009
    %v3037 = vlaneseq
    %v3038 = vshrl.u32 %v3037, 7
    %v3039 = vsub.s32 0, %v3038
    %v3040 = vrot.slane %v3035, %v3039
    %v3042 = vpack.i.b16 %v3010, %v3010
    %v3044 = vlaneseq
    %v3045 = vshrl.u32 %v3044, 7
    %v3046 = vsub.s32 0, %v3045
    %v3047 = vrot.slane %v3042, %v3046
    %v3049 = vpack.i.b16 %v3011, %v3011
    %v3051 = vlaneseq
    %v3052 = vshrl.u32 %v3051, 7
    %v3053 = vsub.s32 0, %v3052
    %v3054 = vrot.slane %v3049, %v3053
    %v3056 = vpack.i.b16 %v3012, %v3012
    %v3058 = vlaneseq
    %v3059 = vshrl.u32 %v3058, 7
    %v3060 = vsub.s32 0, %v3059
    %v3061 = vrot.slane %v3056, %v3060
    %v3062 = vadd.bf16 %v2962, %v3019
    %v3063 = vadd.bf16 %v2963, %v3026
    %v3064 = vadd.bf16 %v2964, %v3033
    %v3065 = vadd.bf16 %v2965, %v3040
    %v3066 = vadd.bf16 %v2966, %v3047
    %v3067 = vadd.bf16 %v2967, %v3054
    %v3068 = vadd.bf16 %v2968, %v3061
    %v3069 = vmul.bf16 %v3062, 1056980736
    %v3070 = vmul.bf16 %v3063, 1056980736
    %v3071 = vmul.bf16 %v3064, 1056980736
    %v3072 = vmul.bf16 %v3065, 1056980736
    %v3073 = vmul.bf16 %v3066, 1056980736
    %v3074 = vmul.bf16 %v3067, 1056980736
    %v3075 = vmul.bf16 %v3068, 1056980736
    %v3076 = vtanh.bf16.pop %v3069
    %v3077 = vtanh.bf16.pop %v3070
    %v3078 = vtanh.bf16.pop %v3071
    %v3079 = vtanh.bf16.pop %v3072
    %v3080 = vtanh.bf16.pop %v3073
    %v3081 = vtanh.bf16.pop %v3074
    %v3082 = vtanh.bf16.pop %v3075
    %v3083 = vmul.bf16 %v3076, 1056980736
    %v3084 = vmul.bf16 %v3077, 1056980736
    %v3085 = vmul.bf16 %v3078, 1056980736
    %v3086 = vmul.bf16 %v3079, 1056980736
    %v3087 = vmul.bf16 %v3080, 1056980736
    %v3088 = vmul.bf16 %v3081, 1056980736
    %v3089 = vmul.bf16 %v3082, 1056980736
    %v3090 = vadd.bf16 %v3083, 1056980736
    %v3091 = vadd.bf16 %v3084, 1056980736
    %v3092 = vadd.bf16 %v3085, 1056980736
    %v3093 = vadd.bf16 %v3086, 1056980736
    %v3094 = vadd.bf16 %v3087, 1056980736
    %v3095 = vadd.bf16 %v3088, 1056980736
    %v3096 = vadd.bf16 %v3089, 1056980736
    %v3104 = vunpack.c.l.b16 %v3090
    %v3105 = vunpack.c.l.b16 %v3091
    %v3106 = vunpack.c.l.b16 %v3092
    %v3107 = vunpack.c.l.b16 %v3093
    %v3108 = vunpack.c.l.b16 %v3094
    %v3109 = vunpack.c.l.b16 %v3095
    %v3110 = vunpack.c.l.b16 %v3096
    %v3111 = vpack.c.b16 %v3105, %v3104
    %v3112 = vpack.c.b16 %v3107, %v3106
    %v3113 = vpack.c.b16 %v3109, %v3108
    %v3114 = vpack.c.b16 %v3110, %v3110
    %3119 = vst [vmem:[#allocation2] sm:$0xff] %v3111
    %3120 = vst [vmem:[#allocation2 + $0x8] sm:$0xff] %v3112
    %3121 = vst [vmem:[#allocation2 + $0x10] sm:$0xff] %v3113
    %vm3122 = vcmask 125952
    %3123 = vst.msk [vmem:[#allocation2 + $0x18] sm:$0xf] %vm3122, %v3114
    // Predicated region
    $region30: #{_forward.1} parent=1 // pred_check
      _
    $region31: #{_forward.1} parent=1 // pred_check_branch
      %3125 = sbr.rel (0) target = $region33
    $region32: #{_forward.1} parent=1 // pred_region
      %s3127 = ssub.s32 448, 448
      %3128 = vsyncadd [#allocation3], %s3127
      %s3130 = sshll.u32 [#allocation2], 4
      %s3131 = int_to_ptr.vmem [resolvable:$true] %s3130
      %3133 = dma.vmem_to_hbm [thread:$0]  %s3131, 448, %s7, [#allocation3]
    $region33: #{_forward.1} parent=1 // pred_fallthru
      _
    // Predicated region
    $region34: #{_forward.1} parent=1 // pred_check
      _
    $region35: #{_forward.1} parent=1 // pred_check_branch
      %3135 = sbr.rel (0) target = $region37
    $region36: #{_forward.1} parent=1 // pred_region
      %3136 = dma.done [#allocation3], 448
    $region37: #{_forward.1} parent=1 // pred_fallthru
      _
    %3137 = vsyncpa [#allocation3], 1

</llo_original>
